<compile_context>
chip_gen: v7x
topology: tpu7x:2x2x1
jax: 0.10.0
libtpu: 0.0.40
codegen_flags: <defaults>
</compile_context>

<pallas_src>
import functools
import math

import jax
import jax.numpy as jnp
from jax.experimental import pallas as pl
from jax.experimental.pallas import tpu as pltpu


def _mha_kernel(q_ref, h_ref, wq_ref, wkv_ref, wo_ref, out_ref, *,
                n_heads, key_dim, value_dim, n_query, graph_size, block_b,
                norm_factor):
    Bt = block_b
    D = q_ref.shape[-1]
    E = out_ref.shape[-1]
    H, kd, vd = n_heads, key_dim, value_dim
    Hkd = H * kd

    # Flatten (Bt, seq, D) tiles so the fused projections are single 2-D
    # lane-dense MXU matmuls covering all batches in this grid step.
    q2d = q_ref[...].reshape(Bt * n_query, D)
    h2d = h_ref[...].reshape(Bt * graph_size, D)

    # Fused projections: one MXU matmul for Q (all heads) and one for K+V
    # (all heads) instead of 3*H tiny (x, 32)@(32, 8) dots.
    proj_q = jnp.dot(q2d, wq_ref[...],
                     preferred_element_type=jnp.float32)        # (Bt*nq, H*kd)
    proj_kv = jnp.dot(h2d, wkv_ref[...],
                      preferred_element_type=jnp.float32)       # (Bt*T, H*(kd+vd))

    # Fold 1/sqrt(kd) into Q once (softmax is invariant to where the scale is
    # applied before the scores) -> one VPU mul instead of H score scalings.
    proj_q = proj_q * norm_factor

    proj_q3 = proj_q.reshape(Bt, n_query, Hkd)
    proj_kv3 = proj_kv.reshape(Bt, graph_size, Hkd + H * vd)

    head_outs = []
    for hd in range(H):                      # static unroll over heads only
        Qh = proj_q3[:, :, hd * kd:(hd + 1) * kd]                     # (Bt, nq, kd)
        Kh = proj_kv3[:, :, hd * kd:(hd + 1) * kd]                    # (Bt, T,  kd)
        Vh = proj_kv3[:, :, Hkd + hd * vd:Hkd + (hd + 1) * vd]        # (Bt, T,  vd)

        # Scores batched over the whole batch block, contracting the last
        # dims directly (no materialized K transpose).
        scores = jnp.einsum('bqk,btk->bqt', Qh, Kh,
                            preferred_element_type=jnp.float32)       # (Bt, nq, T)
        scores = scores - jnp.max(scores, axis=-1, keepdims=True)
        e = jnp.exp(scores)
        denom = jnp.sum(e, axis=-1, keepdims=True)
        r = pl.reciprocal(denom, approx=True)       # EUP slot, ~free vs VALU divide
        r = r * (2.0 - denom * r)                   # one Newton step -> f32 accuracy
        attn = e * r                                # softmax

        head_outs.append(jnp.einsum('bqt,btv->bqv', attn, Vh,
                                    preferred_element_type=jnp.float32))  # (Bt, nq, vd)

    # Head-major concatenation (matches heads.permute(1,2,0,3).reshape in the
    # PyTorch module), then a single fused output projection on the MXU.
    heads = jnp.concatenate(head_outs, axis=-1)                      # (Bt, nq, H*vd)
    out2d = jnp.dot(heads.reshape(Bt * n_query, H * vd), wo_ref[...],
                    preferred_element_type=jnp.float32)              # (Bt*nq, E)
    out_ref[...] = out2d.reshape(Bt, n_query, E).astype(out_ref.dtype)


def _pick_block_b(batch, max_block=8):
    """Largest divisor of `batch` <= max_block.

    Per-batch work is tiny, so fat grid steps (amortizing the ~0.35us/step
    overhead) dominate; for larger batches this still leaves multiple
    parallel steps for v7x megacore sharding.
    """
    best = 1
    for d in range(1, min(max_block, batch) + 1):
        if batch % d == 0:
            best = d
    return best


def multi_head_attention(q, h, w_query, w_key, w_value, w_out, *, block_b=None):
    B, n_query, D = q.shape
    T = h.shape[1]
    H, _, key_dim = w_query.shape
    value_dim = w_value.shape[-1]
    E = w_out.shape[-1]
    norm_factor = 1.0 / math.sqrt(key_dim)

    if block_b is None:
        block_b = _pick_block_b(B)
    assert B % block_b == 0, "block_b must divide batch"

    # Pre-fuse weights once in the wrapper (XLA) so the kernel gets wide,
    # lane-dense weight tiles instead of four narrow (H, D, 8) stacks.
    wq2d = jnp.transpose(w_query, (1, 0, 2)).reshape(D, H * key_dim)    # (D, H*kd)
    wk2d = jnp.transpose(w_key, (1, 0, 2)).reshape(D, H * key_dim)      # (D, H*kd)
    wv2d = jnp.transpose(w_value, (1, 0, 2)).reshape(D, H * value_dim)  # (D, H*vd)
    w_kv = jnp.concatenate([wk2d, wv2d], axis=1)                        # (D, H*kd+H*vd)
    w_out2d = w_out.reshape(H * value_dim, E)                           # (H*vd, E)
    kv_w = w_kv.shape[1]

    kernel = functools.partial(
        _mha_kernel, n_heads=H, key_dim=key_dim, value_dim=value_dim,
        n_query=n_query, graph_size=T, block_b=block_b, norm_factor=norm_factor)

    return pl.pallas_call(
        kernel,
        out_shape=jax.ShapeDtypeStruct((B, n_query, E), q.dtype),
        grid=(B // block_b,),
        in_specs=[
            pl.BlockSpec((block_b, n_query, D), lambda b: (b, 0, 0)),
            pl.BlockSpec((block_b, T, D), lambda b: (b, 0, 0)),
            pl.BlockSpec((D, H * key_dim), lambda b: (0, 0)),
            pl.BlockSpec((D, kv_w), lambda b: (0, 0)),
            pl.BlockSpec((H * value_dim, E), lambda b: (0, 0)),
        ],
        out_specs=pl.BlockSpec((block_b, n_query, E), lambda b: (b, 0, 0)),
        compiler_params=pltpu.CompilerParams(
            dimension_semantics=("parallel",)),
    )(q, h, wq2d, w_kv, w_out2d)


def _reference(q, h, w_query, w_key, w_value, w_out):
    """Pure-JAX reference mirroring the PyTorch forward (mask=None)."""
    H, D, key_dim = w_query.shape
    norm_factor = 1.0 / math.sqrt(key_dim)
    Q = jnp.einsum('bqd,hdk->hbqk', q, w_query)
    K = jnp.einsum('btd,hdk->hbtk', h, w_key)
    V = jnp.einsum('btd,hdv->hbtv', h, w_value)
    U = norm_factor * jnp.einsum('hbqk,hbtk->hbqt', Q, K)
    attn = jax.nn.softmax(U, axis=-1)
    heads = jnp.einsum('hbqt,hbtv->hbqv', attn, V)   # (H, B, nq, vd)
    B, nq = q.shape[0], q.shape[1]
    E = w_out.shape[-1]
    concat = jnp.transpose(heads, (1, 2, 0, 3)).reshape(B * nq, -1)
    out = concat @ w_out.reshape(-1, E)
    return out.reshape(B, nq, E)


if __name__ == "__main__":
    # Small shapes consistent with the module's forward.
    batch_size = 2
    n_query = 8
    graph_size = 8
    embedding_dim = 32
    n_heads = 4
    key_dim = embedding_dim // n_heads   # = value_dim = 8

    key = jax.random.PRNGKey(0)
    kq, kh, k1, k2, k3, k4 = jax.random.split(key, 6)

    q = jax.random.normal(kq, (batch_size, n_query, embedding_dim), jnp.float32)
    h = jax.random.normal(kh, (batch_size, graph_size, embedding_dim), jnp.float32)

    # Deterministic parameter init matching init_parameters(): U(-stdv, stdv)
    # with stdv = 1/sqrt(param.shape[-1]).
    stdv_qkv = 1.0 / math.sqrt(key_dim)
    stdv_out = 1.0 / math.sqrt(embedding_dim)
    w_query = jax.random.uniform(k1, (n_heads, embedding_dim, key_dim),
                                 jnp.float32, -stdv_qkv, stdv_qkv)
    w_key = jax.random.uniform(k2, (n_heads, embedding_dim, key_dim),
                               jnp.float32, -stdv_qkv, stdv_qkv)
    w_value = jax.random.uniform(k3, (n_heads, embedding_dim, key_dim),
                                 jnp.float32, -stdv_qkv, stdv_qkv)
    w_out = jax.random.uniform(k4, (n_heads, key_dim, embedding_dim),
                               jnp.float32, -stdv_out, stdv_out)

    out = multi_head_attention(q, h, w_query, w_key, w_value, w_out)
    out = jax.block_until_ready(out)

    ref = _reference(q, h, w_query, w_key, w_value, w_out)
    assert out.shape == (batch_size, n_query, embedding_dim)
    assert jnp.allclose(out, ref, rtol=1e-5, atol=1e-5), "mismatch vs reference"

    print("KERNEL_OK")
</pallas_src>

<mosaic_0001>
module attributes {stable_mosaic.version = 11 : i64} {
  func.func @_mha_kernel(%arg0: i32, %arg1: memref<2x8x32xf32, #tpu.memory_space<vmem>>, %arg2: memref<2x8x32xf32, #tpu.memory_space<vmem>>, %arg3: memref<32x32xf32, #tpu.memory_space<vmem>>, %arg4: memref<32x64xf32, #tpu.memory_space<vmem>>, %arg5: memref<32x32xf32, #tpu.memory_space<vmem>>, %arg6: memref<2x8x32xf32, #tpu.memory_space<vmem>>) attributes {dimension_semantics = [#tpu.dimension_semantics<parallel>], iteration_bounds = array<i64: 1>, scalar_prefetch = 0 : i64, scratch_operands = 0 : i64, tpu.core_type = #tpu.core_type<tc>, window_params = [{transform_indices = @transform_0, window_bounds = array<i64: 2, 8, 32>}, {transform_indices = @transform_1, window_bounds = array<i64: 2, 8, 32>}, {pipeline_mode = #tpu.pipeline_mode<synchronous>, transform_indices = @transform_2, window_bounds = array<i64: 32, 32>}, {pipeline_mode = #tpu.pipeline_mode<synchronous>, transform_indices = @transform_3, window_bounds = array<i64: 32, 64>}, {pipeline_mode = #tpu.pipeline_mode<synchronous>, transform_indices = @transform_4, window_bounds = array<i64: 32, 32>}, {transform_indices = @transform_5, window_bounds = array<i64: 2, 8, 32>}]} {
    %c0 = arith.constant 0 : index
    %c0_0 = arith.constant 0 : index
    %c0_1 = arith.constant 0 : index
    %0 = vector.load %arg1[%c0, %c0_0, %c0_1] : memref<2x8x32xf32, #tpu.memory_space<vmem>>, vector<2x8x32xf32>
    %1 = vector.shape_cast %0 : vector<2x8x32xf32> to vector<16x32xf32>
    %c0_2 = arith.constant 0 : index
    %c0_3 = arith.constant 0 : index
    %c0_4 = arith.constant 0 : index
    %2 = vector.load %arg2[%c0_2, %c0_3, %c0_4] : memref<2x8x32xf32, #tpu.memory_space<vmem>>, vector<2x8x32xf32>
    %3 = vector.shape_cast %2 : vector<2x8x32xf32> to vector<16x32xf32>
    %c0_5 = arith.constant 0 : index
    %c0_6 = arith.constant 0 : index
    %4 = vector.load %arg3[%c0_5, %c0_6] : memref<32x32xf32, #tpu.memory_space<vmem>>, vector<32x32xf32>
    %cst = arith.constant dense<0.000000e+00> : vector<16x32xf32>
    %5 = tpu.matmul %1, %4, %cst {dimension_numbers = #tpu.dot_dimension_numbers<[1], [0], [0], [1], [0, 0, 1, 1], [], []>} : vector<16x32xf32>, vector<32x32xf32>, vector<16x32xf32> -> vector<16x32xf32>
    %c0_7 = arith.constant 0 : index
    %c0_8 = arith.constant 0 : index
    %6 = vector.load %arg4[%c0_7, %c0_8] : memref<32x64xf32, #tpu.memory_space<vmem>>, vector<32x64xf32>
    %cst_9 = arith.constant dense<0.000000e+00> : vector<16x64xf32>
    %7 = tpu.matmul %3, %6, %cst_9 {dimension_numbers = #tpu.dot_dimension_numbers<[1], [0], [0], [1], [0, 0, 1, 1], [], []>} : vector<16x32xf32>, vector<32x64xf32>, vector<16x64xf32> -> vector<16x64xf32>
    %cst_10 = arith.constant 0.353553385 : f32
    %8 = vector.broadcast %cst_10 : f32 to vector<16x32xf32>
    %9 = arith.mulf %5, %8 : vector<16x32xf32>
    %10 = vector.shape_cast %9 : vector<16x32xf32> to vector<2x8x32xf32>
    %11 = vector.shape_cast %7 : vector<16x64xf32> to vector<2x8x64xf32>
    %12 = vector.extract_strided_slice %10 {offsets = [0, 0, 0], sizes = [2, 8, 8], strides = [1, 1, 1]} : vector<2x8x32xf32> to vector<2x8x8xf32>
    %13 = vector.extract_strided_slice %11 {offsets = [0, 0, 0], sizes = [2, 8, 8], strides = [1, 1, 1]} : vector<2x8x64xf32> to vector<2x8x8xf32>
    %14 = vector.extract_strided_slice %11 {offsets = [0, 0, 32], sizes = [2, 8, 8], strides = [1, 1, 1]} : vector<2x8x64xf32> to vector<2x8x8xf32>
    "tpu.trace_start"() <{level = 10 : i32, message = "bqk,btk->bqt"}> : () -> ()
    %cst_11 = arith.constant dense<0.000000e+00> : vector<2x8x8xf32>
    %15 = tpu.matmul %12, %13, %cst_11 {dimension_numbers = #tpu.dot_dimension_numbers<[2], [2], [1], [1], [0, 0, 0, 1, 1, 1], [0], [0]>} : vector<2x8x8xf32>, vector<2x8x8xf32>, vector<2x8x8xf32> -> vector<2x8x8xf32>
    "tpu.trace_stop"() : () -> ()
    %cst_12 = arith.constant dense<0xFF800000> : vector<2x8xf32>
    %16 = vector.multi_reduction <maximumf>, %15, %cst_12 [2] : vector<2x8x8xf32> to vector<2x8xf32>
    %17 = vector.shape_cast %16 : vector<2x8xf32> to vector<2x8x1xf32>
    %18 = vector.broadcast %17 : vector<2x8x1xf32> to vector<2x8x8xf32>
    %19 = arith.subf %15, %18 : vector<2x8x8xf32>
    %20 = math.exp %19 : vector<2x8x8xf32>
    %cst_13 = arith.constant dense<0.000000e+00> : vector<2x8xf32>
    %21 = vector.multi_reduction <add>, %20, %cst_13 [2] : vector<2x8x8xf32> to vector<2x8xf32>
    %22 = vector.shape_cast %21 : vector<2x8xf32> to vector<2x8x1xf32>
    %23 = tpu.reciprocal %22 {approx = true} : vector<2x8x1xf32> -> vector<2x8x1xf32>
    %24 = arith.mulf %22, %23 : vector<2x8x1xf32>
    %cst_14 = arith.constant 2.000000e+00 : f32
    %25 = vector.broadcast %cst_14 : f32 to vector<2x8x1xf32>
    %26 = arith.subf %25, %24 : vector<2x8x1xf32>
    %27 = arith.mulf %23, %26 : vector<2x8x1xf32>
    %28 = vector.broadcast %27 : vector<2x8x1xf32> to vector<2x8x8xf32>
    %29 = arith.mulf %20, %28 : vector<2x8x8xf32>
    "tpu.trace_start"() <{level = 10 : i32, message = "bqt,btv->bqv"}> : () -> ()
    %cst_15 = arith.constant dense<0.000000e+00> : vector<2x8x8xf32>
    %30 = tpu.matmul %29, %14, %cst_15 {dimension_numbers = #tpu.dot_dimension_numbers<[2], [1], [1], [2], [0, 0, 0, 1, 1, 2], [0], [0]>} : vector<2x8x8xf32>, vector<2x8x8xf32>, vector<2x8x8xf32> -> vector<2x8x8xf32>
    "tpu.trace_stop"() : () -> ()
    %31 = vector.extract_strided_slice %10 {offsets = [0, 0, 8], sizes = [2, 8, 8], strides = [1, 1, 1]} : vector<2x8x32xf32> to vector<2x8x8xf32>
    %32 = vector.extract_strided_slice %11 {offsets = [0, 0, 8], sizes = [2, 8, 8], strides = [1, 1, 1]} : vector<2x8x64xf32> to vector<2x8x8xf32>
    %33 = vector.extract_strided_slice %11 {offsets = [0, 0, 40], sizes = [2, 8, 8], strides = [1, 1, 1]} : vector<2x8x64xf32> to vector<2x8x8xf32>
    "tpu.trace_start"() <{level = 10 : i32, message = "bqk,btk->bqt"}> : () -> ()
    %cst_16 = arith.constant dense<0.000000e+00> : vector<2x8x8xf32>
    %34 = tpu.matmul %31, %32, %cst_16 {dimension_numbers = #tpu.dot_dimension_numbers<[2], [2], [1], [1], [0, 0, 0, 1, 1, 1], [0], [0]>} : vector<2x8x8xf32>, vector<2x8x8xf32>, vector<2x8x8xf32> -> vector<2x8x8xf32>
    "tpu.trace_stop"() : () -> ()
    %cst_17 = arith.constant dense<0xFF800000> : vector<2x8xf32>
    %35 = vector.multi_reduction <maximumf>, %34, %cst_17 [2] : vector<2x8x8xf32> to vector<2x8xf32>
    %36 = vector.shape_cast %35 : vector<2x8xf32> to vector<2x8x1xf32>
    %37 = vector.broadcast %36 : vector<2x8x1xf32> to vector<2x8x8xf32>
    %38 = arith.subf %34, %37 : vector<2x8x8xf32>
    %39 = math.exp %38 : vector<2x8x8xf32>
    %cst_18 = arith.constant dense<0.000000e+00> : vector<2x8xf32>
    %40 = vector.multi_reduction <add>, %39, %cst_18 [2] : vector<2x8x8xf32> to vector<2x8xf32>
    %41 = vector.shape_cast %40 : vector<2x8xf32> to vector<2x8x1xf32>
    %42 = tpu.reciprocal %41 {approx = true} : vector<2x8x1xf32> -> vector<2x8x1xf32>
    %43 = arith.mulf %41, %42 : vector<2x8x1xf32>
    %cst_19 = arith.constant 2.000000e+00 : f32
    %44 = vector.broadcast %cst_19 : f32 to vector<2x8x1xf32>
    %45 = arith.subf %44, %43 : vector<2x8x1xf32>
    %46 = arith.mulf %42, %45 : vector<2x8x1xf32>
    %47 = vector.broadcast %46 : vector<2x8x1xf32> to vector<2x8x8xf32>
    %48 = arith.mulf %39, %47 : vector<2x8x8xf32>
    "tpu.trace_start"() <{level = 10 : i32, message = "bqt,btv->bqv"}> : () -> ()
    %cst_20 = arith.constant dense<0.000000e+00> : vector<2x8x8xf32>
    %49 = tpu.matmul %48, %33, %cst_20 {dimension_numbers = #tpu.dot_dimension_numbers<[2], [1], [1], [2], [0, 0, 0, 1, 1, 2], [0], [0]>} : vector<2x8x8xf32>, vector<2x8x8xf32>, vector<2x8x8xf32> -> vector<2x8x8xf32>
    "tpu.trace_stop"() : () -> ()
    %50 = vector.extract_strided_slice %10 {offsets = [0, 0, 16], sizes = [2, 8, 8], strides = [1, 1, 1]} : vector<2x8x32xf32> to vector<2x8x8xf32>
    %51 = vector.extract_strided_slice %11 {offsets = [0, 0, 16], sizes = [2, 8, 8], strides = [1, 1, 1]} : vector<2x8x64xf32> to vector<2x8x8xf32>
    %52 = vector.extract_strided_slice %11 {offsets = [0, 0, 48], sizes = [2, 8, 8], strides = [1, 1, 1]} : vector<2x8x64xf32> to vector<2x8x8xf32>
    "tpu.trace_start"() <{level = 10 : i32, message = "bqk,btk->bqt"}> : () -> ()
    %cst_21 = arith.constant dense<0.000000e+00> : vector<2x8x8xf32>
    %53 = tpu.matmul %50, %51, %cst_21 {dimension_numbers = #tpu.dot_dimension_numbers<[2], [2], [1], [1], [0, 0, 0, 1, 1, 1], [0], [0]>} : vector<2x8x8xf32>, vector<2x8x8xf32>, vector<2x8x8xf32> -> vector<2x8x8xf32>
    "tpu.trace_stop"() : () -> ()
    %cst_22 = arith.constant dense<0xFF800000> : vector<2x8xf32>
    %54 = vector.multi_reduction <maximumf>, %53, %cst_22 [2] : vector<2x8x8xf32> to vector<2x8xf32>
    %55 = vector.shape_cast %54 : vector<2x8xf32> to vector<2x8x1xf32>
    %56 = vector.broadcast %55 : vector<2x8x1xf32> to vector<2x8x8xf32>
    %57 = arith.subf %53, %56 : vector<2x8x8xf32>
    %58 = math.exp %57 : vector<2x8x8xf32>
    %cst_23 = arith.constant dense<0.000000e+00> : vector<2x8xf32>
    %59 = vector.multi_reduction <add>, %58, %cst_23 [2] : vector<2x8x8xf32> to vector<2x8xf32>
    %60 = vector.shape_cast %59 : vector<2x8xf32> to vector<2x8x1xf32>
    %61 = tpu.reciprocal %60 {approx = true} : vector<2x8x1xf32> -> vector<2x8x1xf32>
    %62 = arith.mulf %60, %61 : vector<2x8x1xf32>
    %cst_24 = arith.constant 2.000000e+00 : f32
    %63 = vector.broadcast %cst_24 : f32 to vector<2x8x1xf32>
    %64 = arith.subf %63, %62 : vector<2x8x1xf32>
    %65 = arith.mulf %61, %64 : vector<2x8x1xf32>
    %66 = vector.broadcast %65 : vector<2x8x1xf32> to vector<2x8x8xf32>
    %67 = arith.mulf %58, %66 : vector<2x8x8xf32>
    "tpu.trace_start"() <{level = 10 : i32, message = "bqt,btv->bqv"}> : () -> ()
    %cst_25 = arith.constant dense<0.000000e+00> : vector<2x8x8xf32>
    %68 = tpu.matmul %67, %52, %cst_25 {dimension_numbers = #tpu.dot_dimension_numbers<[2], [1], [1], [2], [0, 0, 0, 1, 1, 2], [0], [0]>} : vector<2x8x8xf32>, vector<2x8x8xf32>, vector<2x8x8xf32> -> vector<2x8x8xf32>
    "tpu.trace_stop"() : () -> ()
    %69 = vector.extract_strided_slice %10 {offsets = [0, 0, 24], sizes = [2, 8, 8], strides = [1, 1, 1]} : vector<2x8x32xf32> to vector<2x8x8xf32>
    %70 = vector.extract_strided_slice %11 {offsets = [0, 0, 24], sizes = [2, 8, 8], strides = [1, 1, 1]} : vector<2x8x64xf32> to vector<2x8x8xf32>
    %71 = vector.extract_strided_slice %11 {offsets = [0, 0, 56], sizes = [2, 8, 8], strides = [1, 1, 1]} : vector<2x8x64xf32> to vector<2x8x8xf32>
    "tpu.trace_start"() <{level = 10 : i32, message = "bqk,btk->bqt"}> : () -> ()
    %cst_26 = arith.constant dense<0.000000e+00> : vector<2x8x8xf32>
    %72 = tpu.matmul %69, %70, %cst_26 {dimension_numbers = #tpu.dot_dimension_numbers<[2], [2], [1], [1], [0, 0, 0, 1, 1, 1], [0], [0]>} : vector<2x8x8xf32>, vector<2x8x8xf32>, vector<2x8x8xf32> -> vector<2x8x8xf32>
    "tpu.trace_stop"() : () -> ()
    %cst_27 = arith.constant dense<0xFF800000> : vector<2x8xf32>
    %73 = vector.multi_reduction <maximumf>, %72, %cst_27 [2] : vector<2x8x8xf32> to vector<2x8xf32>
    %74 = vector.shape_cast %73 : vector<2x8xf32> to vector<2x8x1xf32>
    %75 = vector.broadcast %74 : vector<2x8x1xf32> to vector<2x8x8xf32>
    %76 = arith.subf %72, %75 : vector<2x8x8xf32>
    %77 = math.exp %76 : vector<2x8x8xf32>
    %cst_28 = arith.constant dense<0.000000e+00> : vector<2x8xf32>
    %78 = vector.multi_reduction <add>, %77, %cst_28 [2] : vector<2x8x8xf32> to vector<2x8xf32>
    %79 = vector.shape_cast %78 : vector<2x8xf32> to vector<2x8x1xf32>
    %80 = tpu.reciprocal %79 {approx = true} : vector<2x8x1xf32> -> vector<2x8x1xf32>
    %81 = arith.mulf %79, %80 : vector<2x8x1xf32>
    %cst_29 = arith.constant 2.000000e+00 : f32
    %82 = vector.broadcast %cst_29 : f32 to vector<2x8x1xf32>
    %83 = arith.subf %82, %81 : vector<2x8x1xf32>
    %84 = arith.mulf %80, %83 : vector<2x8x1xf32>
    %85 = vector.broadcast %84 : vector<2x8x1xf32> to vector<2x8x8xf32>
    %86 = arith.mulf %77, %85 : vector<2x8x8xf32>
    "tpu.trace_start"() <{level = 10 : i32, message = "bqt,btv->bqv"}> : () -> ()
    %cst_30 = arith.constant dense<0.000000e+00> : vector<2x8x8xf32>
    %87 = tpu.matmul %86, %71, %cst_30 {dimension_numbers = #tpu.dot_dimension_numbers<[2], [1], [1], [2], [0, 0, 0, 1, 1, 2], [0], [0]>} : vector<2x8x8xf32>, vector<2x8x8xf32>, vector<2x8x8xf32> -> vector<2x8x8xf32>
    "tpu.trace_stop"() : () -> ()
    %88 = tpu.concatenate %30, %49, %68, %87 in 2 : vector<2x8x8xf32>, vector<2x8x8xf32>, vector<2x8x8xf32>, vector<2x8x8xf32> -> vector<2x8x32xf32>
    %89 = vector.shape_cast %88 : vector<2x8x32xf32> to vector<16x32xf32>
    %c0_31 = arith.constant 0 : index
    %c0_32 = arith.constant 0 : index
    %90 = vector.load %arg5[%c0_31, %c0_32] : memref<32x32xf32, #tpu.memory_space<vmem>>, vector<32x32xf32>
    %cst_33 = arith.constant dense<0.000000e+00> : vector<16x32xf32>
    %91 = tpu.matmul %89, %90, %cst_33 {dimension_numbers = #tpu.dot_dimension_numbers<[1], [0], [0], [1], [0, 0, 1, 1], [], []>} : vector<16x32xf32>, vector<32x32xf32>, vector<16x32xf32> -> vector<16x32xf32>
    %92 = vector.shape_cast %91 : vector<16x32xf32> to vector<2x8x32xf32>
    %c0_34 = arith.constant 0 : index
    %c0_35 = arith.constant 0 : index
    %c0_36 = arith.constant 0 : index
    %93 = vector.load %arg6[%c0_34, %c0_35, %c0_36] : memref<2x8x32xf32, #tpu.memory_space<vmem>>, vector<2x8x32xf32>
    tpu.vector_store %arg6[%c0_34, %c0_35, %c0_36], %92 {strides = array<i32>} : memref<2x8x32xf32, #tpu.memory_space<vmem>>, vector<2x8x32xf32>,
    return
  }
  func.func @transform_0(%arg0: i32) -> (i32, i32, i32) {
    %c0_i32 = arith.constant 0 : i32
    %c0_i32_0 = arith.constant 0 : i32
    %c0_i32_1 = arith.constant 0 : i32
    return %arg0, %c0_i32, %c0_i32_0 : i32, i32, i32
  }
  func.func @transform_1(%arg0: i32) -> (i32, i32, i32) {
    %c0_i32 = arith.constant 0 : i32
    %c0_i32_0 = arith.constant 0 : i32
    %c0_i32_1 = arith.constant 0 : i32
    return %arg0, %c0_i32, %c0_i32_0 : i32, i32, i32
  }
  func.func @transform_2(%arg0: i32) -> (i32, i32) {
    %c0_i32 = arith.constant 0 : i32
    %c0_i32_0 = arith.constant 0 : i32
    %c0_i32_1 = arith.constant 0 : i32
    return %c0_i32, %c0_i32_0 : i32, i32
  }
  func.func @transform_3(%arg0: i32) -> (i32, i32) {
    %c0_i32 = arith.constant 0 : i32
    %c0_i32_0 = arith.constant 0 : i32
    %c0_i32_1 = arith.constant 0 : i32
    return %c0_i32, %c0_i32_0 : i32, i32
  }
  func.func @transform_4(%arg0: i32) -> (i32, i32) {
    %c0_i32 = arith.constant 0 : i32
    %c0_i32_0 = arith.constant 0 : i32
    %c0_i32_1 = arith.constant 0 : i32
    return %c0_i32, %c0_i32_0 : i32, i32
  }
  func.func @transform_5(%arg0: i32) -> (i32, i32, i32) {
    %c0_i32 = arith.constant 0 : i32
    %c0_i32_0 = arith.constant 0 : i32
    %c0_i32_1 = arith.constant 0 : i32
    return %arg0, %c0_i32, %c0_i32_0 : i32, i32, i32
  }
}

</mosaic_0001>

<llo_original>
// kernel: tpu_custom_call.1
$region0: #{tpu_custom_call.1}
  #allocation0 [shape = 'u32[]', space=smem, size = 0x4, offset = 0x4, fixed_abs, tag = 'smem constant byte address 0x4 - core index']
  #allocation1 [shape = 'u32[144,128]{1,0:T(1,128)}', space=vmem, size = 0x12000, scoped, tag = 'internal scratch']
  %s0 = inlined_call_operand.hbm [shape: f32[2,8,32], index: 0, kind: input, shape index: {}]
  %s1 = inlined_call_operand.hbm [shape: f32[2,8,32], index: 1, kind: input, shape index: {}]
  %s2 = inlined_call_operand.hbm [shape: f32[32,32], index: 2, kind: input, shape index: {}]
  %s3 = inlined_call_operand.hbm [shape: f32[32,64], index: 3, kind: input, shape index: {}]
  %s4 = inlined_call_operand.hbm [shape: f32[32,32], index: 4, kind: input, shape index: {}]
  %s5 = inlined_call_operand.hbm [shape: f32[2,8,32], index: 5, kind: output, shape index: {}]
  %s6 = sld [smem:[#allocation0]]
  $region50: #{tpu_custom_call.1} parent=0
    _
  %s8 = ssub.s32 1, %s6
  %s9 = scalar_select 0, %s8, %s6
  $region1: #{tpu_custom_call.1} parent=0
    #allocation2 [shape = 'u8[8192]{0}', space=vmem, size = 0x2000, scoped, tag = 'input window, operand 0, single buffered']
    #allocation3 [shape = 's32[1]{0}', space=sflag, size = 0x4, scoped, tag = 'scoped memory for tpu_custom_call.1']
    #allocation4 [shape = 's32[1]{0}', space=sflag, size = 0x4, scoped, tag = 'scoped memory for tpu_custom_call.1']
    #allocation5 [shape = 'u8[8192]{0}', space=vmem, size = 0x2000, scoped, tag = 'input window, operand 1, single buffered']
    #allocation6 [shape = 's32[1]{0}', space=sflag, size = 0x4, scoped, tag = 'scoped memory for tpu_custom_call.1']
    #allocation7 [shape = 'u8[16384]{0}', space=vmem, size = 0x4000, scoped, tag = 'input window, operand 2, single buffered']
    #allocation8 [shape = 'u8[16384]{0}', space=vmem, size = 0x4000, scoped, tag = 'input window, operand 3, single buffered']
    #allocation9 [shape = 's32[1]{0}', space=sflag, size = 0x4, scoped, tag = 'scoped memory for tpu_custom_call.1']
    #allocation10 [shape = 'u8[16384]{0}', space=vmem, size = 0x4000, scoped, tag = 'input window, operand 4, single buffered']
    #allocation11 [shape = 'u8[8192]{0}', space=vmem, size = 0x2000, scoped, tag = 'output window, operand 0, single buffered']
    %10 = vsyncpa [#allocation3], 0
    %11 = vsyncpa [#allocation6], 0
    %12 = vsyncpa [#allocation9], 0
    %13 = vsyncpa [#allocation4], 0
    // Predicated region
    $region2: #{tpu_custom_call.1} parent=1 // pred_check
      _
    $region3: #{tpu_custom_call.1} parent=1 // pred_check_branch
      %15 = sbr.rel (0) target = $region5
    $region4: #{tpu_custom_call.1} parent=1 // pred_region
      %s17 = ssub.s32 256, 256
      %18 = vsyncadd [#allocation3], %s17
      %s19 = sshll.u32 [#allocation2], 4
      %s20 = int_to_ptr.vmem [resolvable:$true] %s19
      %25 = dma.hbm_to_vmem [thread:$0]  %s0, 256, %s20, [#allocation3], 128, 128, 8
    $region5: #{tpu_custom_call.1} parent=1 // pred_fallthru
      _
    // Predicated region
    $region6: #{tpu_custom_call.1} parent=1 // pred_check
      _
    $region7: #{tpu_custom_call.1} parent=1 // pred_check_branch
      %27 = sbr.rel (0) target = $region9
    $region8: #{tpu_custom_call.1} parent=1 // pred_region
      %s29 = ssub.s32 256, 256
      %30 = vsyncadd [#allocation6], %s29
      %s31 = sshll.u32 [#allocation5], 4
      %s32 = int_to_ptr.vmem [resolvable:$true] %s31
      %37 = dma.hbm_to_vmem [thread:$0]  %s1, 256, %s32, [#allocation6], 128, 128, 8
    $region9: #{tpu_custom_call.1} parent=1 // pred_fallthru
      _
    // Predicated region
    $region10: #{tpu_custom_call.1} parent=1 // pred_check
      _
    $region11: #{tpu_custom_call.1} parent=1 // pred_check_branch
      %39 = sbr.rel (0) target = $region13
    $region12: #{tpu_custom_call.1} parent=1 // pred_region
      %s41 = ssub.s32 512, 512
      %42 = vsyncadd [#allocation6], %s41
      %s43 = sshll.u32 [#allocation7], 4
      %s44 = int_to_ptr.vmem [resolvable:$true] %s43
      %49 = dma.hbm_to_vmem [thread:$0]  %s2, 512, %s44, [#allocation6], 128, 128, 8
    $region13: #{tpu_custom_call.1} parent=1 // pred_fallthru
      _
    // Predicated region
    $region14: #{tpu_custom_call.1} parent=1 // pred_check
      _
    $region15: #{tpu_custom_call.1} parent=1 // pred_check_branch
      %51 = sbr.rel (0) target = $region17
    $region16: #{tpu_custom_call.1} parent=1 // pred_region
      %s53 = ssub.s32 512, 512
      %54 = vsyncadd [#allocation9], %s53
      %s55 = sshll.u32 [#allocation8], 4
      %s56 = int_to_ptr.vmem [resolvable:$true] %s55
      %61 = dma.hbm_to_vmem [thread:$0]  %s3, 512, %s56, [#allocation9], 128, 128, 8
    $region17: #{tpu_custom_call.1} parent=1 // pred_fallthru
      _
    // Predicated region
    $region18: #{tpu_custom_call.1} parent=1 // pred_check
      _
    $region19: #{tpu_custom_call.1} parent=1 // pred_check_branch
      %63 = sbr.rel (0) target = $region21
    $region20: #{tpu_custom_call.1} parent=1 // pred_region
      %s65 = ssub.s32 512, 512
      %66 = vsyncadd [#allocation9], %s65
      %s67 = sshll.u32 [#allocation10], 4
      %s68 = int_to_ptr.vmem [resolvable:$true] %s67
      %73 = dma.hbm_to_vmem [thread:$0]  %s4, 512, %s68, [#allocation9], 128, 128, 8
    $region21: #{tpu_custom_call.1} parent=1 // pred_fallthru
      _
    // Predicated region
    $region22: #{tpu_custom_call.1} parent=1 // pred_check
      _
    $region23: #{tpu_custom_call.1} parent=1 // pred_check_branch
      %75 = sbr.rel (0) target = $region25
    $region24: #{tpu_custom_call.1} parent=1 // pred_region
      %76 = dma.done [#allocation3], 256
    $region25: #{tpu_custom_call.1} parent=1 // pred_fallthru
      _
    // Predicated region
    $region26: #{tpu_custom_call.1} parent=1 // pred_check
      _
    $region27: #{tpu_custom_call.1} parent=1 // pred_check_branch
      %78 = sbr.rel (0) target = $region29
    $region28: #{tpu_custom_call.1} parent=1 // pred_region
      %79 = dma.done [#allocation6], 256
    $region29: #{tpu_custom_call.1} parent=1 // pred_fallthru
      _
    // Predicated region
    $region30: #{tpu_custom_call.1} parent=1 // pred_check
      _
    $region31: #{tpu_custom_call.1} parent=1 // pred_check_branch
      %81 = sbr.rel (0) target = $region33
    $region32: #{tpu_custom_call.1} parent=1 // pred_region
      %82 = dma.done [#allocation6], 512
    $region33: #{tpu_custom_call.1} parent=1 // pred_fallthru
      _
    // Predicated region
    $region34: #{tpu_custom_call.1} parent=1 // pred_check
      _
    $region35: #{tpu_custom_call.1} parent=1 // pred_check_branch
      %84 = sbr.rel (0) target = $region37
    $region36: #{tpu_custom_call.1} parent=1 // pred_region
      %85 = dma.done [#allocation9], 512
    $region37: #{tpu_custom_call.1} parent=1 // pred_fallthru
      _
    // Predicated region
    $region38: #{tpu_custom_call.1} parent=1 // pred_check
      _
    $region39: #{tpu_custom_call.1} parent=1 // pred_check_branch
      %87 = sbr.rel (0) target = $region41
    $region40: #{tpu_custom_call.1} parent=1 // pred_region
      %88 = dma.done [#allocation9], 512
    $region41: #{tpu_custom_call.1} parent=1 // pred_fallthru
      _
    %v89 = vld [vmem:[#allocation2] sm:$0xff]
    %v90 = vld [vmem:[#allocation2 + $0x8] sm:$0xff]
    %v91 = vld [vmem:[#allocation5] sm:$0xff]
    %v92 = vld [vmem:[#allocation5 + $0x8] sm:$0xff]
    %v93 = vld [vmem:[#allocation7] sm:$0xff]
    %v94 = vld [vmem:[#allocation7 + $0x8] sm:$0xff]
    %v95 = vld [vmem:[#allocation7 + $0x10] sm:$0xff]
    %v96 = vld [vmem:[#allocation7 + $0x18] sm:$0xff]
    %vm97 = vcmask 261120
    %v99 = vsel %vm97, %v89, 0
    %v102 = vsel %vm97, %v90, 0
    %104 = vmatprep.subr.mxu0 0.0
    %105 = vmatpush1.msra.mxu0 %v93
    %106 = vmatprep.subr.mxu0 0.0
    %107 = vmatpush1.msra.mxu0 %v94
    %108 = vmatprep.subr.mxu0 0.0
    %109 = vmatpush1.msra.mxu0 %v95
    %110 = vmatprep.subr.mxu0 0.0
    %111 = vmatpush1.msra.mxu0 %v96
    %112 = vmatprep.subr.mxu0 0.0
    %113 = vmatpush1.msra.mxu0 0.0
    %114 = vmatprep.subr.mxu0 0.0
    %115 = vmatpush1.msra.mxu0 0.0
    %116 = vmatprep.subr.mxu0 0.0
    %117 = vmatpush1.msra.mxu0 0.0
    %118 = vmatprep.subr.mxu0 0.0
    %119 = vmatpush1.msra.mxu0 0.0
    %120 = vmatprep.subr.mxu0 0.0
    %121 = vmatpush1.msra.mxu0 0.0
    %122 = vmatprep.subr.mxu0 0.0
    %123 = vmatpush1.msra.mxu0 0.0
    %124 = vmatprep.subr.mxu0 0.0
    %125 = vmatpush1.msra.mxu0 0.0
    %126 = vmatprep.subr.mxu0 0.0
    %127 = vmatpush1.msra.mxu0 0.0
    %128 = vmatprep.subr.mxu0 0.0
    %129 = vmatpush1.msra.mxu0 0.0
    %130 = vmatprep.subr.mxu0 0.0
    %131 = vmatpush1.msra.mxu0 0.0
    %132 = vmatprep.subr.mxu0 0.0
    %133 = vmatpush1.msra.mxu0 0.0
    %134 = vmatprep.subr.mxu0 0.0
    %135 = vmatpush1.msra.mxu0 0.0
    %136 = vmatprep.subr.mxu0 0.0
    %137 = vmatpush1.msra.mxu0 0.0
    %138 = vmatprep.subr.mxu0 0.0
    %139 = vmatpush1.msra.mxu0 0.0
    %140 = vmatprep.subr.mxu0 0.0
    %141 = vmatpush1.msra.mxu0 0.0
    %142 = vmatprep.subr.mxu0 0.0
    %143 = vmatpush1.msra.mxu0 0.0
    %144 = vmatprep.subr.mxu0 0.0
    %145 = vmatpush1.msra.mxu0 0.0
    %146 = vmatprep.subr.mxu0 0.0
    %147 = vmatpush1.msra.mxu0 0.0
    %148 = vmatprep.subr.mxu0 0.0
    %149 = vmatpush1.msra.mxu0 0.0
    %150 = vmatprep.subr.mxu0 0.0
    %151 = vmatpush1.msra.mxu0 0.0
    %152 = vmatprep.subr.mxu0 0.0
    %153 = vmatpush1.msra.mxu0 0.0
    %154 = vmatprep.subr.mxu0 0.0
    %155 = vmatpush1.msra.mxu0 0.0
    %156 = vmatprep.subr.mxu0 0.0
    %157 = vmatpush1.msra.mxu0 0.0
    %158 = vmatprep.subr.mxu0 0.0
    %159 = vmatpush1.msra.mxu0 0.0
    %160 = vmatprep.subr.mxu0 0.0
    %161 = vmatpush1.msra.mxu0 0.0
    %162 = vmatprep.subr.mxu0 0.0
    %163 = vmatpush1.msra.mxu0 0.0
    %164 = vmatprep.subr.mxu0 0.0
    %165 = vmatpush1.msra.mxu0 0.0
    %166 = vmatprep.subr.mxu0 0.0
    %167 = vmatpush1.msra.mxu0 0.0
    %168 = vmatprep.mubr.f32.mxu0 0.0
    %169 = vmatmul.mubr.f32.gmra.mrb[0].mxu0 %v99
    %v170 = vpop.f32.mrb[0].mxu0
    %v171 = vadd.f32 0.0, %v170
    %v172 = vpop.f32.mrb[0].mxu0
    %173 = vmatprep.mubr.f32.mxu0 0.0
    %174 = vmatmul.mubr.f32.gmra.mrb[0].mxu0 %v102
    %v175 = vpop.f32.mrb[0].mxu0
    %v176 = vadd.f32 0.0, %v175
    %v177 = vpop.f32.mrb[0].mxu0
    %178 = vdwg.mxu0
    %v179 = vld [vmem:[#allocation8] sm:$0xff]
    %v180 = vld [vmem:[#allocation8 + $0x8] sm:$0xff]
    %v181 = vld [vmem:[#allocation8 + $0x10] sm:$0xff]
    %v182 = vld [vmem:[#allocation8 + $0x18] sm:$0xff]
    %v184 = vsel %vm97, %v91, 0
    %v187 = vsel %vm97, %v92, 0
    %189 = vmatprep.subr.mxu0 0.0
    %190 = vmatpush1.msra.mxu0 %v179
    %191 = vmatprep.subr.mxu0 0.0
    %192 = vmatpush1.msra.mxu0 %v180
    %193 = vmatprep.subr.mxu0 0.0
    %194 = vmatpush1.msra.mxu0 %v181
    %195 = vmatprep.subr.mxu0 0.0
    %196 = vmatpush1.msra.mxu0 %v182
    %197 = vmatprep.subr.mxu0 0.0
    %198 = vmatpush1.msra.mxu0 0.0
    %199 = vmatprep.subr.mxu0 0.0
    %200 = vmatpush1.msra.mxu0 0.0
    %201 = vmatprep.subr.mxu0 0.0
    %202 = vmatpush1.msra.mxu0 0.0
    %203 = vmatprep.subr.mxu0 0.0
    %204 = vmatpush1.msra.mxu0 0.0
    %205 = vmatprep.subr.mxu0 0.0
    %206 = vmatpush1.msra.mxu0 0.0
    %207 = vmatprep.subr.mxu0 0.0
    %208 = vmatpush1.msra.mxu0 0.0
    %209 = vmatprep.subr.mxu0 0.0
    %210 = vmatpush1.msra.mxu0 0.0
    %211 = vmatprep.subr.mxu0 0.0
    %212 = vmatpush1.msra.mxu0 0.0
    %213 = vmatprep.subr.mxu0 0.0
    %214 = vmatpush1.msra.mxu0 0.0
    %215 = vmatprep.subr.mxu0 0.0
    %216 = vmatpush1.msra.mxu0 0.0
    %217 = vmatprep.subr.mxu0 0.0
    %218 = vmatpush1.msra.mxu0 0.0
    %219 = vmatprep.subr.mxu0 0.0
    %220 = vmatpush1.msra.mxu0 0.0
    %221 = vmatprep.subr.mxu0 0.0
    %222 = vmatpush1.msra.mxu0 0.0
    %223 = vmatprep.subr.mxu0 0.0
    %224 = vmatpush1.msra.mxu0 0.0
    %225 = vmatprep.subr.mxu0 0.0
    %226 = vmatpush1.msra.mxu0 0.0
    %227 = vmatprep.subr.mxu0 0.0
    %228 = vmatpush1.msra.mxu0 0.0
    %229 = vmatprep.subr.mxu0 0.0
    %230 = vmatpush1.msra.mxu0 0.0
    %231 = vmatprep.subr.mxu0 0.0
    %232 = vmatpush1.msra.mxu0 0.0
    %233 = vmatprep.subr.mxu0 0.0
    %234 = vmatpush1.msra.mxu0 0.0
    %235 = vmatprep.subr.mxu0 0.0
    %236 = vmatpush1.msra.mxu0 0.0
    %237 = vmatprep.subr.mxu0 0.0
    %238 = vmatpush1.msra.mxu0 0.0
    %239 = vmatprep.subr.mxu0 0.0
    %240 = vmatpush1.msra.mxu0 0.0
    %241 = vmatprep.subr.mxu0 0.0
    %242 = vmatpush1.msra.mxu0 0.0
    %243 = vmatprep.subr.mxu0 0.0
    %244 = vmatpush1.msra.mxu0 0.0
    %245 = vmatprep.subr.mxu0 0.0
    %246 = vmatpush1.msra.mxu0 0.0
    %247 = vmatprep.subr.mxu0 0.0
    %248 = vmatpush1.msra.mxu0 0.0
    %249 = vmatprep.subr.mxu0 0.0
    %250 = vmatpush1.msra.mxu0 0.0
    %251 = vmatprep.subr.mxu0 0.0
    %252 = vmatpush1.msra.mxu0 0.0
    %253 = vmatprep.mubr.f32.mxu0 0.0
    %254 = vmatmul.mubr.f32.gmra.mrb[0].mxu0 %v184
    %v255 = vpop.f32.mrb[0].mxu0
    %v256 = vadd.f32 0.0, %v255
    %v257 = vpop.f32.mrb[0].mxu0
    %258 = vmatprep.mubr.f32.mxu0 0.0
    %259 = vmatmul.mubr.f32.gmra.mrb[0].mxu0 %v187
    %v260 = vpop.f32.mrb[0].mxu0
    %v261 = vadd.f32 0.0, %v260
    %v262 = vpop.f32.mrb[0].mxu0
    %263 = vdwg.mxu0
    %v264 = vmul.f32 %v171, 0.35355338
    %v265 = vmul.f32 %v176, 0.35355338
    %vm266 = vcmask 64512
    %v268 = vsel %vm266, %v264, 0
    %v271 = vsel %vm266, %v256, 0
    %273 = vmatprep.subr.mxu0 0.0
    %274 = vmatpush1.xpose.msra.mxu0 %v271
    %275 = vmatprep.subr.mxu0 0.0
    %276 = vmatpush1.xpose.msra.mxu0 0.0
    %277 = vmatprep.subr.mxu0 0.0
    %278 = vmatpush1.xpose.msra.mxu0 0.0
    %279 = vmatprep.subr.mxu0 0.0
    %280 = vmatpush1.xpose.msra.mxu0 0.0
    %281 = vmatprep.subr.mxu0 0.0
    %282 = vmatpush1.xpose.msra.mxu0 0.0
    %283 = vmatprep.subr.mxu0 0.0
    %284 = vmatpush1.xpose.msra.mxu0 0.0
    %285 = vmatprep.subr.mxu0 0.0
    %286 = vmatpush1.xpose.msra.mxu0 0.0
    %287 = vmatprep.subr.mxu0 0.0
    %288 = vmatpush1.xpose.msra.mxu0 0.0
    %289 = vmatprep.subr.mxu0 0.0
    %290 = vmatpush1.xpose.msra.mxu0 0.0
    %291 = vmatprep.subr.mxu0 0.0
    %292 = vmatpush1.xpose.msra.mxu0 0.0
    %293 = vmatprep.subr.mxu0 0.0
    %294 = vmatpush1.xpose.msra.mxu0 0.0
    %295 = vmatprep.subr.mxu0 0.0
    %296 = vmatpush1.xpose.msra.mxu0 0.0
    %297 = vmatprep.subr.mxu0 0.0
    %298 = vmatpush1.xpose.msra.mxu0 0.0
    %299 = vmatprep.subr.mxu0 0.0
    %300 = vmatpush1.xpose.msra.mxu0 0.0
    %301 = vmatprep.subr.mxu0 0.0
    %302 = vmatpush1.xpose.msra.mxu0 0.0
    %303 = vmatprep.subr.mxu0 0.0
    %304 = vmatpush1.xpose.msra.mxu0 0.0
    %305 = vmatprep.subr.mxu0 0.0
    %306 = vmatpush1.xpose.msra.mxu0 0.0
    %307 = vmatprep.subr.mxu0 0.0
    %308 = vmatpush1.xpose.msra.mxu0 0.0
    %309 = vmatprep.subr.mxu0 0.0
    %310 = vmatpush1.xpose.msra.mxu0 0.0
    %311 = vmatprep.subr.mxu0 0.0
    %312 = vmatpush1.xpose.msra.mxu0 0.0
    %313 = vmatprep.subr.mxu0 0.0
    %314 = vmatpush1.xpose.msra.mxu0 0.0
    %315 = vmatprep.subr.mxu0 0.0
    %316 = vmatpush1.xpose.msra.mxu0 0.0
    %317 = vmatprep.subr.mxu0 0.0
    %318 = vmatpush1.xpose.msra.mxu0 0.0
    %319 = vmatprep.subr.mxu0 0.0
    %320 = vmatpush1.xpose.msra.mxu0 0.0
    %321 = vmatprep.subr.mxu0 0.0
    %322 = vmatpush1.xpose.msra.mxu0 0.0
    %323 = vmatprep.subr.mxu0 0.0
    %324 = vmatpush1.xpose.msra.mxu0 0.0
    %325 = vmatprep.subr.mxu0 0.0
    %326 = vmatpush1.xpose.msra.mxu0 0.0
    %327 = vmatprep.subr.mxu0 0.0
    %328 = vmatpush1.xpose.msra.mxu0 0.0
    %329 = vmatprep.subr.mxu0 0.0
    %330 = vmatpush1.xpose.msra.mxu0 0.0
    %331 = vmatprep.subr.mxu0 0.0
    %332 = vmatpush1.xpose.msra.mxu0 0.0
    %333 = vmatprep.subr.mxu0 0.0
    %334 = vmatpush1.xpose.msra.mxu0 0.0
    %335 = vmatprep.subr.mxu0 0.0
    %336 = vmatpush1.xpose.msra.mxu0 0.0
    %337 = vmatprep.mubr.f32.mxu0 0.0
    %338 = vmatmul.mubr.f32.gmra.mrb[0].mxu0 %v268
    %v339 = vpop.f32.mrb[0].mxu0
    %v340 = vadd.f32 0.0, %v339
    %v341 = vpop.f32.mrb[0].mxu0
    %342 = vdwg.mxu0
    %v344 = vsel %vm266, %v265, 0
    %v347 = vsel %vm266, %v261, 0
    %349 = vmatprep.subr.mxu0 0.0
    %350 = vmatpush1.xpose.msra.mxu0 %v347
    %351 = vmatprep.subr.mxu0 0.0
    %352 = vmatpush1.xpose.msra.mxu0 0.0
    %353 = vmatprep.subr.mxu0 0.0
    %354 = vmatpush1.xpose.msra.mxu0 0.0
    %355 = vmatprep.subr.mxu0 0.0
    %356 = vmatpush1.xpose.msra.mxu0 0.0
    %357 = vmatprep.subr.mxu0 0.0
    %358 = vmatpush1.xpose.msra.mxu0 0.0
    %359 = vmatprep.subr.mxu0 0.0
    %360 = vmatpush1.xpose.msra.mxu0 0.0
    %361 = vmatprep.subr.mxu0 0.0
    %362 = vmatpush1.xpose.msra.mxu0 0.0
    %363 = vmatprep.subr.mxu0 0.0
    %364 = vmatpush1.xpose.msra.mxu0 0.0
    %365 = vmatprep.subr.mxu0 0.0
    %366 = vmatpush1.xpose.msra.mxu0 0.0
    %367 = vmatprep.subr.mxu0 0.0
    %368 = vmatpush1.xpose.msra.mxu0 0.0
    %369 = vmatprep.subr.mxu0 0.0
    %370 = vmatpush1.xpose.msra.mxu0 0.0
    %371 = vmatprep.subr.mxu0 0.0
    %372 = vmatpush1.xpose.msra.mxu0 0.0
    %373 = vmatprep.subr.mxu0 0.0
    %374 = vmatpush1.xpose.msra.mxu0 0.0
    %375 = vmatprep.subr.mxu0 0.0
    %376 = vmatpush1.xpose.msra.mxu0 0.0
    %377 = vmatprep.subr.mxu0 0.0
    %378 = vmatpush1.xpose.msra.mxu0 0.0
    %379 = vmatprep.subr.mxu0 0.0
    %380 = vmatpush1.xpose.msra.mxu0 0.0
    %381 = vmatprep.subr.mxu0 0.0
    %382 = vmatpush1.xpose.msra.mxu0 0.0
    %383 = vmatprep.subr.mxu0 0.0
    %384 = vmatpush1.xpose.msra.mxu0 0.0
    %385 = vmatprep.subr.mxu0 0.0
    %386 = vmatpush1.xpose.msra.mxu0 0.0
    %387 = vmatprep.subr.mxu0 0.0
    %388 = vmatpush1.xpose.msra.mxu0 0.0
    %389 = vmatprep.subr.mxu0 0.0
    %390 = vmatpush1.xpose.msra.mxu0 0.0
    %391 = vmatprep.subr.mxu0 0.0
    %392 = vmatpush1.xpose.msra.mxu0 0.0
    %393 = vmatprep.subr.mxu0 0.0
    %394 = vmatpush1.xpose.msra.mxu0 0.0
    %395 = vmatprep.subr.mxu0 0.0
    %396 = vmatpush1.xpose.msra.mxu0 0.0
    %397 = vmatprep.subr.mxu0 0.0
    %398 = vmatpush1.xpose.msra.mxu0 0.0
    %399 = vmatprep.subr.mxu0 0.0
    %400 = vmatpush1.xpose.msra.mxu0 0.0
    %401 = vmatprep.subr.mxu0 0.0
    %402 = vmatpush1.xpose.msra.mxu0 0.0
    %403 = vmatprep.subr.mxu0 0.0
    %404 = vmatpush1.xpose.msra.mxu0 0.0
    %405 = vmatprep.subr.mxu0 0.0
    %406 = vmatpush1.xpose.msra.mxu0 0.0
    %407 = vmatprep.subr.mxu0 0.0
    %408 = vmatpush1.xpose.msra.mxu0 0.0
    %409 = vmatprep.subr.mxu0 0.0
    %410 = vmatpush1.xpose.msra.mxu0 0.0
    %411 = vmatprep.subr.mxu0 0.0
    %412 = vmatpush1.xpose.msra.mxu0 0.0
    %413 = vmatprep.mubr.f32.mxu0 0.0
    %414 = vmatmul.mubr.f32.gmra.mrb[0].mxu0 %v344
    %v415 = vpop.f32.mrb[0].mxu0
    %v416 = vadd.f32 0.0, %v415
    %v417 = vpop.f32.mrb[0].mxu0
    %418 = vdwg.mxu0
    %v419 = vsel %vm266, %v340, -inf
    %420 = vmax.xlane.f32.xlu0 %v419
    %v421 = vpop.xlane.xlu0 %420
    %v422 = vsel %vm266, %v416, -inf
    %423 = vmax.xlane.f32.xlu0 %v422
    %v424 = vpop.xlane.xlu0 %423
    %v425 = vsub.f32 %v340, %v421
    %v426 = vsub.f32 %v416, %v424
    %v427 = vmul.f32 %v425, 1.442695
    %v428 = vpow.pop %v427
    %v429 = vmul.f32 %v426, 1.442695
    %v430 = vpow.pop %v429
    %v431 = vsel %vm266, %v428, 0.0
    %432 = vadd.xlane.f32.xlu0 %v431
    %v433 = vpop.xlane.xlu0 %432
    %v434 = vsel %vm266, %v430, 0.0
    %435 = vadd.xlane.f32.xlu0 %v434
    %v436 = vpop.xlane.xlu0 %435
    %v437 = vrcp.pop %v433
    %v438 = vrcp.pop %v436
    %v439 = vmul.f32 %v433, %v437
    %v440 = vmul.f32 %v436, %v438
    %v441 = vsub.f32 2.0, %v439
    %v442 = vsub.f32 2.0, %v440
    %v443 = vmul.f32 %v437, %v441
    %v444 = vmul.f32 %v438, %v442
    %v445 = vmul.f32 %v428, %v443
    %v446 = vmul.f32 %v430, %v444
    %447 = vrot.lane.b32.xlu0 %v256, 96
    %v448 = vpop.permute.xlu0 %447
    %v451 = vsel %vm266, %v445, 0
    %453 = vmatprep.subr.mxu0 0.0
    %454 = vmatpush1.msra.mxu0 %v448
    %455 = vmatprep.subr.mxu0 0.0
    %456 = vmatpush1.msra.mxu0 0.0
    %457 = vmatprep.subr.mxu0 0.0
    %458 = vmatpush1.msra.mxu0 0.0
    %459 = vmatprep.subr.mxu0 0.0
    %460 = vmatpush1.msra.mxu0 0.0
    %461 = vmatprep.subr.mxu0 0.0
    %462 = vmatpush1.msra.mxu0 0.0
    %463 = vmatprep.subr.mxu0 0.0
    %464 = vmatpush1.msra.mxu0 0.0
    %465 = vmatprep.subr.mxu0 0.0
    %466 = vmatpush1.msra.mxu0 0.0
    %467 = vmatprep.subr.mxu0 0.0
    %468 = vmatpush1.msra.mxu0 0.0
    %469 = vmatprep.subr.mxu0 0.0
    %470 = vmatpush1.msra.mxu0 0.0
    %471 = vmatprep.subr.mxu0 0.0
    %472 = vmatpush1.msra.mxu0 0.0
    %473 = vmatprep.subr.mxu0 0.0
    %474 = vmatpush1.msra.mxu0 0.0
    %475 = vmatprep.subr.mxu0 0.0
    %476 = vmatpush1.msra.mxu0 0.0
    %477 = vmatprep.subr.mxu0 0.0
    %478 = vmatpush1.msra.mxu0 0.0
    %479 = vmatprep.subr.mxu0 0.0
    %480 = vmatpush1.msra.mxu0 0.0
    %481 = vmatprep.subr.mxu0 0.0
    %482 = vmatpush1.msra.mxu0 0.0
    %483 = vmatprep.subr.mxu0 0.0
    %484 = vmatpush1.msra.mxu0 0.0
    %485 = vmatprep.subr.mxu0 0.0
    %486 = vmatpush1.msra.mxu0 0.0
    %487 = vmatprep.subr.mxu0 0.0
    %488 = vmatpush1.msra.mxu0 0.0
    %489 = vmatprep.subr.mxu0 0.0
    %490 = vmatpush1.msra.mxu0 0.0
    %491 = vmatprep.subr.mxu0 0.0
    %492 = vmatpush1.msra.mxu0 0.0
    %493 = vmatprep.subr.mxu0 0.0
    %494 = vmatpush1.msra.mxu0 0.0
    %495 = vmatprep.subr.mxu0 0.0
    %496 = vmatpush1.msra.mxu0 0.0
    %497 = vmatprep.subr.mxu0 0.0
    %498 = vmatpush1.msra.mxu0 0.0
    %499 = vmatprep.subr.mxu0 0.0
    %500 = vmatpush1.msra.mxu0 0.0
    %501 = vmatprep.subr.mxu0 0.0
    %502 = vmatpush1.msra.mxu0 0.0
    %503 = vmatprep.subr.mxu0 0.0
    %504 = vmatpush1.msra.mxu0 0.0
    %505 = vmatprep.subr.mxu0 0.0
    %506 = vmatpush1.msra.mxu0 0.0
    %507 = vmatprep.subr.mxu0 0.0
    %508 = vmatpush1.msra.mxu0 0.0
    %509 = vmatprep.subr.mxu0 0.0
    %510 = vmatpush1.msra.mxu0 0.0
    %511 = vmatprep.subr.mxu0 0.0
    %512 = vmatpush1.msra.mxu0 0.0
    %513 = vmatprep.subr.mxu0 0.0
    %514 = vmatpush1.msra.mxu0 0.0
    %515 = vmatprep.subr.mxu0 0.0
    %516 = vmatpush1.msra.mxu0 0.0
    %517 = vmatprep.mubr.f32.mxu0 0.0
    %518 = vmatmul.mubr.f32.gmra.mrb[0].mxu0 %v451
    %v519 = vpop.f32.mrb[0].mxu0
    %v520 = vadd.f32 0.0, %v519
    %v521 = vpop.f32.mrb[0].mxu0
    %522 = vdwg.mxu0
    %523 = vrot.lane.b32.xlu0 %v261, 96
    %v524 = vpop.permute.xlu0 %523
    %v527 = vsel %vm266, %v446, 0
    %529 = vmatprep.subr.mxu0 0.0
    %530 = vmatpush1.msra.mxu0 %v524
    %531 = vmatprep.subr.mxu0 0.0
    %532 = vmatpush1.msra.mxu0 0.0
    %533 = vmatprep.subr.mxu0 0.0
    %534 = vmatpush1.msra.mxu0 0.0
    %535 = vmatprep.subr.mxu0 0.0
    %536 = vmatpush1.msra.mxu0 0.0
    %537 = vmatprep.subr.mxu0 0.0
    %538 = vmatpush1.msra.mxu0 0.0
    %539 = vmatprep.subr.mxu0 0.0
    %540 = vmatpush1.msra.mxu0 0.0
    %541 = vmatprep.subr.mxu0 0.0
    %542 = vmatpush1.msra.mxu0 0.0
    %543 = vmatprep.subr.mxu0 0.0
    %544 = vmatpush1.msra.mxu0 0.0
    %545 = vmatprep.subr.mxu0 0.0
    %546 = vmatpush1.msra.mxu0 0.0
    %547 = vmatprep.subr.mxu0 0.0
    %548 = vmatpush1.msra.mxu0 0.0
    %549 = vmatprep.subr.mxu0 0.0
    %550 = vmatpush1.msra.mxu0 0.0
    %551 = vmatprep.subr.mxu0 0.0
    %552 = vmatpush1.msra.mxu0 0.0
    %553 = vmatprep.subr.mxu0 0.0
    %554 = vmatpush1.msra.mxu0 0.0
    %555 = vmatprep.subr.mxu0 0.0
    %556 = vmatpush1.msra.mxu0 0.0
    %557 = vmatprep.subr.mxu0 0.0
    %558 = vmatpush1.msra.mxu0 0.0
    %559 = vmatprep.subr.mxu0 0.0
    %560 = vmatpush1.msra.mxu0 0.0
    %561 = vmatprep.subr.mxu0 0.0
    %562 = vmatpush1.msra.mxu0 0.0
    %563 = vmatprep.subr.mxu0 0.0
    %564 = vmatpush1.msra.mxu0 0.0
    %565 = vmatprep.subr.mxu0 0.0
    %566 = vmatpush1.msra.mxu0 0.0
    %567 = vmatprep.subr.mxu0 0.0
    %568 = vmatpush1.msra.mxu0 0.0
    %569 = vmatprep.subr.mxu0 0.0
    %570 = vmatpush1.msra.mxu0 0.0
    %571 = vmatprep.subr.mxu0 0.0
    %572 = vmatpush1.msra.mxu0 0.0
    %573 = vmatprep.subr.mxu0 0.0
    %574 = vmatpush1.msra.mxu0 0.0
    %575 = vmatprep.subr.mxu0 0.0
    %576 = vmatpush1.msra.mxu0 0.0
    %577 = vmatprep.subr.mxu0 0.0
    %578 = vmatpush1.msra.mxu0 0.0
    %579 = vmatprep.subr.mxu0 0.0
    %580 = vmatpush1.msra.mxu0 0.0
    %581 = vmatprep.subr.mxu0 0.0
    %582 = vmatpush1.msra.mxu0 0.0
    %583 = vmatprep.subr.mxu0 0.0
    %584 = vmatpush1.msra.mxu0 0.0
    %585 = vmatprep.subr.mxu0 0.0
    %586 = vmatpush1.msra.mxu0 0.0
    %587 = vmatprep.subr.mxu0 0.0
    %588 = vmatpush1.msra.mxu0 0.0
    %589 = vmatprep.subr.mxu0 0.0
    %590 = vmatpush1.msra.mxu0 0.0
    %591 = vmatprep.subr.mxu0 0.0
    %592 = vmatpush1.msra.mxu0 0.0
    %593 = vmatprep.mubr.f32.mxu0 0.0
    %594 = vmatmul.mubr.f32.gmra.mrb[0].mxu0 %v527
    %v595 = vpop.f32.mrb[0].mxu0
    %v596 = vadd.f32 0.0, %v595
    %v597 = vpop.f32.mrb[0].mxu0
    %598 = vdwg.mxu0
    %599 = vrot.lane.b32.xlu0 %v264, 120
    %v600 = vpop.permute.xlu0 %599
    %601 = vrot.lane.b32.xlu0 %v256, 120
    %v602 = vpop.permute.xlu0 %601
    %v603 = vsel %vm266, %v600, 0
    %v605 = vsel %vm266, %v602, 0
    %607 = vmatprep.subr.mxu0 0.0
    %608 = vmatpush1.xpose.msra.mxu0 %v605
    %609 = vmatprep.subr.mxu0 0.0
    %610 = vmatpush1.xpose.msra.mxu0 0.0
    %611 = vmatprep.subr.mxu0 0.0
    %612 = vmatpush1.xpose.msra.mxu0 0.0
    %613 = vmatprep.subr.mxu0 0.0
    %614 = vmatpush1.xpose.msra.mxu0 0.0
    %615 = vmatprep.subr.mxu0 0.0
    %616 = vmatpush1.xpose.msra.mxu0 0.0
    %617 = vmatprep.subr.mxu0 0.0
    %618 = vmatpush1.xpose.msra.mxu0 0.0
    %619 = vmatprep.subr.mxu0 0.0
    %620 = vmatpush1.xpose.msra.mxu0 0.0
    %621 = vmatprep.subr.mxu0 0.0
    %622 = vmatpush1.xpose.msra.mxu0 0.0
    %623 = vmatprep.subr.mxu0 0.0
    %624 = vmatpush1.xpose.msra.mxu0 0.0
    %625 = vmatprep.subr.mxu0 0.0
    %626 = vmatpush1.xpose.msra.mxu0 0.0
    %627 = vmatprep.subr.mxu0 0.0
    %628 = vmatpush1.xpose.msra.mxu0 0.0
    %629 = vmatprep.subr.mxu0 0.0
    %630 = vmatpush1.xpose.msra.mxu0 0.0
    %631 = vmatprep.subr.mxu0 0.0
    %632 = vmatpush1.xpose.msra.mxu0 0.0
    %633 = vmatprep.subr.mxu0 0.0
    %634 = vmatpush1.xpose.msra.mxu0 0.0
    %635 = vmatprep.subr.mxu0 0.0
    %636 = vmatpush1.xpose.msra.mxu0 0.0
    %637 = vmatprep.subr.mxu0 0.0
    %638 = vmatpush1.xpose.msra.mxu0 0.0
    %639 = vmatprep.subr.mxu0 0.0
    %640 = vmatpush1.xpose.msra.mxu0 0.0
    %641 = vmatprep.subr.mxu0 0.0
    %642 = vmatpush1.xpose.msra.mxu0 0.0
    %643 = vmatprep.subr.mxu0 0.0
    %644 = vmatpush1.xpose.msra.mxu0 0.0
    %645 = vmatprep.subr.mxu0 0.0
    %646 = vmatpush1.xpose.msra.mxu0 0.0
    %647 = vmatprep.subr.mxu0 0.0
    %648 = vmatpush1.xpose.msra.mxu0 0.0
    %649 = vmatprep.subr.mxu0 0.0
    %650 = vmatpush1.xpose.msra.mxu0 0.0
    %651 = vmatprep.subr.mxu0 0.0
    %652 = vmatpush1.xpose.msra.mxu0 0.0
    %653 = vmatprep.subr.mxu0 0.0
    %654 = vmatpush1.xpose.msra.mxu0 0.0
    %655 = vmatprep.subr.mxu0 0.0
    %656 = vmatpush1.xpose.msra.mxu0 0.0
    %657 = vmatprep.subr.mxu0 0.0
    %658 = vmatpush1.xpose.msra.mxu0 0.0
    %659 = vmatprep.subr.mxu0 0.0
    %660 = vmatpush1.xpose.msra.mxu0 0.0
    %661 = vmatprep.subr.mxu0 0.0
    %662 = vmatpush1.xpose.msra.mxu0 0.0
    %663 = vmatprep.subr.mxu0 0.0
    %664 = vmatpush1.xpose.msra.mxu0 0.0
    %665 = vmatprep.subr.mxu0 0.0
    %666 = vmatpush1.xpose.msra.mxu0 0.0
    %667 = vmatprep.subr.mxu0 0.0
    %668 = vmatpush1.xpose.msra.mxu0 0.0
    %669 = vmatprep.subr.mxu0 0.0
    %670 = vmatpush1.xpose.msra.mxu0 0.0
    %671 = vmatprep.mubr.f32.mxu0 0.0
    %672 = vmatmul.mubr.f32.gmra.mrb[0].mxu0 %v603
    %v673 = vpop.f32.mrb[0].mxu0
    %v674 = vadd.f32 0.0, %v673
    %v675 = vpop.f32.mrb[0].mxu0
    %676 = vdwg.mxu0
    %677 = vrot.lane.b32.xlu0 %v265, 120
    %v678 = vpop.permute.xlu0 %677
    %679 = vrot.lane.b32.xlu0 %v261, 120
    %v680 = vpop.permute.xlu0 %679
    %v681 = vsel %vm266, %v678, 0
    %v683 = vsel %vm266, %v680, 0
    %685 = vmatprep.subr.mxu0 0.0
    %686 = vmatpush1.xpose.msra.mxu0 %v683
    %687 = vmatprep.subr.mxu0 0.0
    %688 = vmatpush1.xpose.msra.mxu0 0.0
    %689 = vmatprep.subr.mxu0 0.0
    %690 = vmatpush1.xpose.msra.mxu0 0.0
    %691 = vmatprep.subr.mxu0 0.0
    %692 = vmatpush1.xpose.msra.mxu0 0.0
    %693 = vmatprep.subr.mxu0 0.0
    %694 = vmatpush1.xpose.msra.mxu0 0.0
    %695 = vmatprep.subr.mxu0 0.0
    %696 = vmatpush1.xpose.msra.mxu0 0.0
    %697 = vmatprep.subr.mxu0 0.0
    %698 = vmatpush1.xpose.msra.mxu0 0.0
    %699 = vmatprep.subr.mxu0 0.0
    %700 = vmatpush1.xpose.msra.mxu0 0.0
    %701 = vmatprep.subr.mxu0 0.0
    %702 = vmatpush1.xpose.msra.mxu0 0.0
    %703 = vmatprep.subr.mxu0 0.0
    %704 = vmatpush1.xpose.msra.mxu0 0.0
    %705 = vmatprep.subr.mxu0 0.0
    %706 = vmatpush1.xpose.msra.mxu0 0.0
    %707 = vmatprep.subr.mxu0 0.0
    %708 = vmatpush1.xpose.msra.mxu0 0.0
    %709 = vmatprep.subr.mxu0 0.0
    %710 = vmatpush1.xpose.msra.mxu0 0.0
    %711 = vmatprep.subr.mxu0 0.0
    %712 = vmatpush1.xpose.msra.mxu0 0.0
    %713 = vmatprep.subr.mxu0 0.0
    %714 = vmatpush1.xpose.msra.mxu0 0.0
    %715 = vmatprep.subr.mxu0 0.0
    %716 = vmatpush1.xpose.msra.mxu0 0.0
    %717 = vmatprep.subr.mxu0 0.0
    %718 = vmatpush1.xpose.msra.mxu0 0.0
    %719 = vmatprep.subr.mxu0 0.0
    %720 = vmatpush1.xpose.msra.mxu0 0.0
    %721 = vmatprep.subr.mxu0 0.0
    %722 = vmatpush1.xpose.msra.mxu0 0.0
    %723 = vmatprep.subr.mxu0 0.0
    %724 = vmatpush1.xpose.msra.mxu0 0.0
    %725 = vmatprep.subr.mxu0 0.0
    %726 = vmatpush1.xpose.msra.mxu0 0.0
    %727 = vmatprep.subr.mxu0 0.0
    %728 = vmatpush1.xpose.msra.mxu0 0.0
    %729 = vmatprep.subr.mxu0 0.0
    %730 = vmatpush1.xpose.msra.mxu0 0.0
    %731 = vmatprep.subr.mxu0 0.0
    %732 = vmatpush1.xpose.msra.mxu0 0.0
    %733 = vmatprep.subr.mxu0 0.0
    %734 = vmatpush1.xpose.msra.mxu0 0.0
    %735 = vmatprep.subr.mxu0 0.0
    %736 = vmatpush1.xpose.msra.mxu0 0.0
    %737 = vmatprep.subr.mxu0 0.0
    %738 = vmatpush1.xpose.msra.mxu0 0.0
    %739 = vmatprep.subr.mxu0 0.0
    %740 = vmatpush1.xpose.msra.mxu0 0.0
    %741 = vmatprep.subr.mxu0 0.0
    %742 = vmatpush1.xpose.msra.mxu0 0.0
    %743 = vmatprep.subr.mxu0 0.0
    %744 = vmatpush1.xpose.msra.mxu0 0.0
    %745 = vmatprep.subr.mxu0 0.0
    %746 = vmatpush1.xpose.msra.mxu0 0.0
    %747 = vmatprep.subr.mxu0 0.0
    %748 = vmatpush1.xpose.msra.mxu0 0.0
    %749 = vmatprep.mubr.f32.mxu0 0.0
    %750 = vmatmul.mubr.f32.gmra.mrb[0].mxu0 %v681
    %v751 = vpop.f32.mrb[0].mxu0
    %v752 = vadd.f32 0.0, %v751
    %v753 = vpop.f32.mrb[0].mxu0
    %754 = vdwg.mxu0
    %v755 = vsel %vm266, %v674, -inf
    %756 = vmax.xlane.f32.xlu0 %v755
    %v757 = vpop.xlane.xlu0 %756
    %v758 = vsel %vm266, %v752, -inf
    %759 = vmax.xlane.f32.xlu0 %v758
    %v760 = vpop.xlane.xlu0 %759
    %v761 = vsub.f32 %v674, %v757
    %v762 = vsub.f32 %v752, %v760
    %v763 = vmul.f32 %v761, 1.442695
    %v764 = vpow.pop %v763
    %v765 = vmul.f32 %v762, 1.442695
    %v766 = vpow.pop %v765
    %v767 = vsel %vm266, %v764, 0.0
    %768 = vadd.xlane.f32.xlu0 %v767
    %v769 = vpop.xlane.xlu0 %768
    %v770 = vsel %vm266, %v766, 0.0
    %771 = vadd.xlane.f32.xlu0 %v770
    %v772 = vpop.xlane.xlu0 %771
    %v773 = vrcp.pop %v769
    %v774 = vrcp.pop %v772
    %v775 = vmul.f32 %v769, %v773
    %v776 = vmul.f32 %v772, %v774
    %v777 = vsub.f32 2.0, %v775
    %v778 = vsub.f32 2.0, %v776
    %v779 = vmul.f32 %v773, %v777
    %v780 = vmul.f32 %v774, %v778
    %v781 = vmul.f32 %v764, %v779
    %v782 = vmul.f32 %v766, %v780
    %783 = vrot.lane.b32.xlu0 %v256, 88
    %v784 = vpop.permute.xlu0 %783
    %v787 = vsel %vm266, %v781, 0
    %789 = vmatprep.subr.mxu0 0.0
    %790 = vmatpush1.msra.mxu0 %v784
    %791 = vmatprep.subr.mxu0 0.0
    %792 = vmatpush1.msra.mxu0 0.0
    %793 = vmatprep.subr.mxu0 0.0
    %794 = vmatpush1.msra.mxu0 0.0
    %795 = vmatprep.subr.mxu0 0.0
    %796 = vmatpush1.msra.mxu0 0.0
    %797 = vmatprep.subr.mxu0 0.0
    %798 = vmatpush1.msra.mxu0 0.0
    %799 = vmatprep.subr.mxu0 0.0
    %800 = vmatpush1.msra.mxu0 0.0
    %801 = vmatprep.subr.mxu0 0.0
    %802 = vmatpush1.msra.mxu0 0.0
    %803 = vmatprep.subr.mxu0 0.0
    %804 = vmatpush1.msra.mxu0 0.0
    %805 = vmatprep.subr.mxu0 0.0
    %806 = vmatpush1.msra.mxu0 0.0
    %807 = vmatprep.subr.mxu0 0.0
    %808 = vmatpush1.msra.mxu0 0.0
    %809 = vmatprep.subr.mxu0 0.0
    %810 = vmatpush1.msra.mxu0 0.0
    %811 = vmatprep.subr.mxu0 0.0
    %812 = vmatpush1.msra.mxu0 0.0
    %813 = vmatprep.subr.mxu0 0.0
    %814 = vmatpush1.msra.mxu0 0.0
    %815 = vmatprep.subr.mxu0 0.0
    %816 = vmatpush1.msra.mxu0 0.0
    %817 = vmatprep.subr.mxu0 0.0
    %818 = vmatpush1.msra.mxu0 0.0
    %819 = vmatprep.subr.mxu0 0.0
    %820 = vmatpush1.msra.mxu0 0.0
    %821 = vmatprep.subr.mxu0 0.0
    %822 = vmatpush1.msra.mxu0 0.0
    %823 = vmatprep.subr.mxu0 0.0
    %824 = vmatpush1.msra.mxu0 0.0
    %825 = vmatprep.subr.mxu0 0.0
    %826 = vmatpush1.msra.mxu0 0.0
    %827 = vmatprep.subr.mxu0 0.0
    %828 = vmatpush1.msra.mxu0 0.0
    %829 = vmatprep.subr.mxu0 0.0
    %830 = vmatpush1.msra.mxu0 0.0
    %831 = vmatprep.subr.mxu0 0.0
    %832 = vmatpush1.msra.mxu0 0.0
    %833 = vmatprep.subr.mxu0 0.0
    %834 = vmatpush1.msra.mxu0 0.0
    %835 = vmatprep.subr.mxu0 0.0
    %836 = vmatpush1.msra.mxu0 0.0
    %837 = vmatprep.subr.mxu0 0.0
    %838 = vmatpush1.msra.mxu0 0.0
    %839 = vmatprep.subr.mxu0 0.0
    %840 = vmatpush1.msra.mxu0 0.0
    %841 = vmatprep.subr.mxu0 0.0
    %842 = vmatpush1.msra.mxu0 0.0
    %843 = vmatprep.subr.mxu0 0.0
    %844 = vmatpush1.msra.mxu0 0.0
    %845 = vmatprep.subr.mxu0 0.0
    %846 = vmatpush1.msra.mxu0 0.0
    %847 = vmatprep.subr.mxu0 0.0
    %848 = vmatpush1.msra.mxu0 0.0
    %849 = vmatprep.subr.mxu0 0.0
    %850 = vmatpush1.msra.mxu0 0.0
    %851 = vmatprep.subr.mxu0 0.0
    %852 = vmatpush1.msra.mxu0 0.0
    %853 = vmatprep.mubr.f32.mxu0 0.0
    %854 = vmatmul.mubr.f32.gmra.mrb[0].mxu0 %v787
    %v855 = vpop.f32.mrb[0].mxu0
    %v856 = vadd.f32 0.0, %v855
    %v857 = vpop.f32.mrb[0].mxu0
    %858 = vdwg.mxu0
    %859 = vrot.lane.b32.xlu0 %v261, 88
    %v860 = vpop.permute.xlu0 %859
    %v863 = vsel %vm266, %v782, 0
    %865 = vmatprep.subr.mxu0 0.0
    %866 = vmatpush1.msra.mxu0 %v860
    %867 = vmatprep.subr.mxu0 0.0
    %868 = vmatpush1.msra.mxu0 0.0
    %869 = vmatprep.subr.mxu0 0.0
    %870 = vmatpush1.msra.mxu0 0.0
    %871 = vmatprep.subr.mxu0 0.0
    %872 = vmatpush1.msra.mxu0 0.0
    %873 = vmatprep.subr.mxu0 0.0
    %874 = vmatpush1.msra.mxu0 0.0
    %875 = vmatprep.subr.mxu0 0.0
    %876 = vmatpush1.msra.mxu0 0.0
    %877 = vmatprep.subr.mxu0 0.0
    %878 = vmatpush1.msra.mxu0 0.0
    %879 = vmatprep.subr.mxu0 0.0
    %880 = vmatpush1.msra.mxu0 0.0
    %881 = vmatprep.subr.mxu0 0.0
    %882 = vmatpush1.msra.mxu0 0.0
    %883 = vmatprep.subr.mxu0 0.0
    %884 = vmatpush1.msra.mxu0 0.0
    %885 = vmatprep.subr.mxu0 0.0
    %886 = vmatpush1.msra.mxu0 0.0
    %887 = vmatprep.subr.mxu0 0.0
    %888 = vmatpush1.msra.mxu0 0.0
    %889 = vmatprep.subr.mxu0 0.0
    %890 = vmatpush1.msra.mxu0 0.0
    %891 = vmatprep.subr.mxu0 0.0
    %892 = vmatpush1.msra.mxu0 0.0
    %893 = vmatprep.subr.mxu0 0.0
    %894 = vmatpush1.msra.mxu0 0.0
    %895 = vmatprep.subr.mxu0 0.0
    %896 = vmatpush1.msra.mxu0 0.0
    %897 = vmatprep.subr.mxu0 0.0
    %898 = vmatpush1.msra.mxu0 0.0
    %899 = vmatprep.subr.mxu0 0.0
    %900 = vmatpush1.msra.mxu0 0.0
    %901 = vmatprep.subr.mxu0 0.0
    %902 = vmatpush1.msra.mxu0 0.0
    %903 = vmatprep.subr.mxu0 0.0
    %904 = vmatpush1.msra.mxu0 0.0
    %905 = vmatprep.subr.mxu0 0.0
    %906 = vmatpush1.msra.mxu0 0.0
    %907 = vmatprep.subr.mxu0 0.0
    %908 = vmatpush1.msra.mxu0 0.0
    %909 = vmatprep.subr.mxu0 0.0
    %910 = vmatpush1.msra.mxu0 0.0
    %911 = vmatprep.subr.mxu0 0.0
    %912 = vmatpush1.msra.mxu0 0.0
    %913 = vmatprep.subr.mxu0 0.0
    %914 = vmatpush1.msra.mxu0 0.0
    %915 = vmatprep.subr.mxu0 0.0
    %916 = vmatpush1.msra.mxu0 0.0
    %917 = vmatprep.subr.mxu0 0.0
    %918 = vmatpush1.msra.mxu0 0.0
    %919 = vmatprep.subr.mxu0 0.0
    %920 = vmatpush1.msra.mxu0 0.0
    %921 = vmatprep.subr.mxu0 0.0
    %922 = vmatpush1.msra.mxu0 0.0
    %923 = vmatprep.subr.mxu0 0.0
    %924 = vmatpush1.msra.mxu0 0.0
    %925 = vmatprep.subr.mxu0 0.0
    %926 = vmatpush1.msra.mxu0 0.0
    %927 = vmatprep.subr.mxu0 0.0
    %928 = vmatpush1.msra.mxu0 0.0
    %929 = vmatprep.mubr.f32.mxu0 0.0
    %930 = vmatmul.mubr.f32.gmra.mrb[0].mxu0 %v863
    %v931 = vpop.f32.mrb[0].mxu0
    %v932 = vadd.f32 0.0, %v931
    %v933 = vpop.f32.mrb[0].mxu0
    %934 = vdwg.mxu0
    %935 = vrot.lane.b32.xlu0 %v264, 112
    %v936 = vpop.permute.xlu0 %935
    %937 = vrot.lane.b32.xlu0 %v256, 112
    %v938 = vpop.permute.xlu0 %937
    %v939 = vsel %vm266, %v936, 0
    %v941 = vsel %vm266, %v938, 0
    %943 = vmatprep.subr.mxu0 0.0
    %944 = vmatpush1.xpose.msra.mxu0 %v941
    %945 = vmatprep.subr.mxu0 0.0
    %946 = vmatpush1.xpose.msra.mxu0 0.0
    %947 = vmatprep.subr.mxu0 0.0
    %948 = vmatpush1.xpose.msra.mxu0 0.0
    %949 = vmatprep.subr.mxu0 0.0
    %950 = vmatpush1.xpose.msra.mxu0 0.0
    %951 = vmatprep.subr.mxu0 0.0
    %952 = vmatpush1.xpose.msra.mxu0 0.0
    %953 = vmatprep.subr.mxu0 0.0
    %954 = vmatpush1.xpose.msra.mxu0 0.0
    %955 = vmatprep.subr.mxu0 0.0
    %956 = vmatpush1.xpose.msra.mxu0 0.0
    %957 = vmatprep.subr.mxu0 0.0
    %958 = vmatpush1.xpose.msra.mxu0 0.0
    %959 = vmatprep.subr.mxu0 0.0
    %960 = vmatpush1.xpose.msra.mxu0 0.0
    %961 = vmatprep.subr.mxu0 0.0
    %962 = vmatpush1.xpose.msra.mxu0 0.0
    %963 = vmatprep.subr.mxu0 0.0
    %964 = vmatpush1.xpose.msra.mxu0 0.0
    %965 = vmatprep.subr.mxu0 0.0
    %966 = vmatpush1.xpose.msra.mxu0 0.0
    %967 = vmatprep.subr.mxu0 0.0
    %968 = vmatpush1.xpose.msra.mxu0 0.0
    %969 = vmatprep.subr.mxu0 0.0
    %970 = vmatpush1.xpose.msra.mxu0 0.0
    %971 = vmatprep.subr.mxu0 0.0
    %972 = vmatpush1.xpose.msra.mxu0 0.0
    %973 = vmatprep.subr.mxu0 0.0
    %974 = vmatpush1.xpose.msra.mxu0 0.0
    %975 = vmatprep.subr.mxu0 0.0
    %976 = vmatpush1.xpose.msra.mxu0 0.0
    %977 = vmatprep.subr.mxu0 0.0
    %978 = vmatpush1.xpose.msra.mxu0 0.0
    %979 = vmatprep.subr.mxu0 0.0
    %980 = vmatpush1.xpose.msra.mxu0 0.0
    %981 = vmatprep.subr.mxu0 0.0
    %982 = vmatpush1.xpose.msra.mxu0 0.0
    %983 = vmatprep.subr.mxu0 0.0
    %984 = vmatpush1.xpose.msra.mxu0 0.0
    %985 = vmatprep.subr.mxu0 0.0
    %986 = vmatpush1.xpose.msra.mxu0 0.0
    %987 = vmatprep.subr.mxu0 0.0
    %988 = vmatpush1.xpose.msra.mxu0 0.0
    %989 = vmatprep.subr.mxu0 0.0
    %990 = vmatpush1.xpose.msra.mxu0 0.0
    %991 = vmatprep.subr.mxu0 0.0
    %992 = vmatpush1.xpose.msra.mxu0 0.0
    %993 = vmatprep.subr.mxu0 0.0
    %994 = vmatpush1.xpose.msra.mxu0 0.0
    %995 = vmatprep.subr.mxu0 0.0
    %996 = vmatpush1.xpose.msra.mxu0 0.0
    %997 = vmatprep.subr.mxu0 0.0
    %998 = vmatpush1.xpose.msra.mxu0 0.0
    %999 = vmatprep.subr.mxu0 0.0
    %1000 = vmatpush1.xpose.msra.mxu0 0.0
    %1001 = vmatprep.subr.mxu0 0.0
    %1002 = vmatpush1.xpose.msra.mxu0 0.0
    %1003 = vmatprep.subr.mxu0 0.0
    %1004 = vmatpush1.xpose.msra.mxu0 0.0
    %1005 = vmatprep.subr.mxu0 0.0
    %1006 = vmatpush1.xpose.msra.mxu0 0.0
    %1007 = vmatprep.mubr.f32.mxu0 0.0
    %1008 = vmatmul.mubr.f32.gmra.mrb[0].mxu0 %v939
    %v1009 = vpop.f32.mrb[0].mxu0
    %v1010 = vadd.f32 0.0, %v1009
    %v1011 = vpop.f32.mrb[0].mxu0
    %1012 = vdwg.mxu0
    %1013 = vrot.lane.b32.xlu0 %v265, 112
    %v1014 = vpop.permute.xlu0 %1013
    %1015 = vrot.lane.b32.xlu0 %v261, 112
    %v1016 = vpop.permute.xlu0 %1015
    %v1017 = vsel %vm266, %v1014, 0
    %v1019 = vsel %vm266, %v1016, 0
    %1021 = vmatprep.subr.mxu0 0.0
    %1022 = vmatpush1.xpose.msra.mxu0 %v1019
    %1023 = vmatprep.subr.mxu0 0.0
    %1024 = vmatpush1.xpose.msra.mxu0 0.0
    %1025 = vmatprep.subr.mxu0 0.0
    %1026 = vmatpush1.xpose.msra.mxu0 0.0
    %1027 = vmatprep.subr.mxu0 0.0
    %1028 = vmatpush1.xpose.msra.mxu0 0.0
    %1029 = vmatprep.subr.mxu0 0.0
    %1030 = vmatpush1.xpose.msra.mxu0 0.0
    %1031 = vmatprep.subr.mxu0 0.0
    %1032 = vmatpush1.xpose.msra.mxu0 0.0
    %1033 = vmatprep.subr.mxu0 0.0
    %1034 = vmatpush1.xpose.msra.mxu0 0.0
    %1035 = vmatprep.subr.mxu0 0.0
    %1036 = vmatpush1.xpose.msra.mxu0 0.0
    %1037 = vmatprep.subr.mxu0 0.0
    %1038 = vmatpush1.xpose.msra.mxu0 0.0
    %1039 = vmatprep.subr.mxu0 0.0
    %1040 = vmatpush1.xpose.msra.mxu0 0.0
    %1041 = vmatprep.subr.mxu0 0.0
    %1042 = vmatpush1.xpose.msra.mxu0 0.0
    %1043 = vmatprep.subr.mxu0 0.0
    %1044 = vmatpush1.xpose.msra.mxu0 0.0
    %1045 = vmatprep.subr.mxu0 0.0
    %1046 = vmatpush1.xpose.msra.mxu0 0.0
    %1047 = vmatprep.subr.mxu0 0.0
    %1048 = vmatpush1.xpose.msra.mxu0 0.0
    %1049 = vmatprep.subr.mxu0 0.0
    %1050 = vmatpush1.xpose.msra.mxu0 0.0
    %1051 = vmatprep.subr.mxu0 0.0
    %1052 = vmatpush1.xpose.msra.mxu0 0.0
    %1053 = vmatprep.subr.mxu0 0.0
    %1054 = vmatpush1.xpose.msra.mxu0 0.0
    %1055 = vmatprep.subr.mxu0 0.0
    %1056 = vmatpush1.xpose.msra.mxu0 0.0
    %1057 = vmatprep.subr.mxu0 0.0
    %1058 = vmatpush1.xpose.msra.mxu0 0.0
    %1059 = vmatprep.subr.mxu0 0.0
    %1060 = vmatpush1.xpose.msra.mxu0 0.0
    %1061 = vmatprep.subr.mxu0 0.0
    %1062 = vmatpush1.xpose.msra.mxu0 0.0
    %1063 = vmatprep.subr.mxu0 0.0
    %1064 = vmatpush1.xpose.msra.mxu0 0.0
    %1065 = vmatprep.subr.mxu0 0.0
    %1066 = vmatpush1.xpose.msra.mxu0 0.0
    %1067 = vmatprep.subr.mxu0 0.0
    %1068 = vmatpush1.xpose.msra.mxu0 0.0
    %1069 = vmatprep.subr.mxu0 0.0
    %1070 = vmatpush1.xpose.msra.mxu0 0.0
    %1071 = vmatprep.subr.mxu0 0.0
    %1072 = vmatpush1.xpose.msra.mxu0 0.0
    %1073 = vmatprep.subr.mxu0 0.0
    %1074 = vmatpush1.xpose.msra.mxu0 0.0
    %1075 = vmatprep.subr.mxu0 0.0
    %1076 = vmatpush1.xpose.msra.mxu0 0.0
    %1077 = vmatprep.subr.mxu0 0.0
    %1078 = vmatpush1.xpose.msra.mxu0 0.0
    %1079 = vmatprep.subr.mxu0 0.0
    %1080 = vmatpush1.xpose.msra.mxu0 0.0
    %1081 = vmatprep.subr.mxu0 0.0
    %1082 = vmatpush1.xpose.msra.mxu0 0.0
    %1083 = vmatprep.subr.mxu0 0.0
    %1084 = vmatpush1.xpose.msra.mxu0 0.0
    %1085 = vmatprep.mubr.f32.mxu0 0.0
    %1086 = vmatmul.mubr.f32.gmra.mrb[0].mxu0 %v1017
    %v1087 = vpop.f32.mrb[0].mxu0
    %v1088 = vadd.f32 0.0, %v1087
    %v1089 = vpop.f32.mrb[0].mxu0
    %1090 = vdwg.mxu0
    %v1091 = vsel %vm266, %v1010, -inf
    %1092 = vmax.xlane.f32.xlu0 %v1091
    %v1093 = vpop.xlane.xlu0 %1092
    %v1094 = vsel %vm266, %v1088, -inf
    %1095 = vmax.xlane.f32.xlu0 %v1094
    %v1096 = vpop.xlane.xlu0 %1095
    %v1097 = vsub.f32 %v1010, %v1093
    %v1098 = vsub.f32 %v1088, %v1096
    %v1099 = vmul.f32 %v1097, 1.442695
    %v1100 = vpow.pop %v1099
    %v1101 = vmul.f32 %v1098, 1.442695
    %v1102 = vpow.pop %v1101
    %v1103 = vsel %vm266, %v1100, 0.0
    %1104 = vadd.xlane.f32.xlu0 %v1103
    %v1105 = vpop.xlane.xlu0 %1104
    %v1106 = vsel %vm266, %v1102, 0.0
    %1107 = vadd.xlane.f32.xlu0 %v1106
    %v1108 = vpop.xlane.xlu0 %1107
    %v1109 = vrcp.pop %v1105
    %v1110 = vrcp.pop %v1108
    %v1111 = vmul.f32 %v1105, %v1109
    %v1112 = vmul.f32 %v1108, %v1110
    %v1113 = vsub.f32 2.0, %v1111
    %v1114 = vsub.f32 2.0, %v1112
    %v1115 = vmul.f32 %v1109, %v1113
    %v1116 = vmul.f32 %v1110, %v1114
    %v1117 = vmul.f32 %v1100, %v1115
    %v1118 = vmul.f32 %v1102, %v1116
    %1119 = vrot.lane.b32.xlu0 %v256, 80
    %v1120 = vpop.permute.xlu0 %1119
    %v1123 = vsel %vm266, %v1117, 0
    %1125 = vmatprep.subr.mxu0 0.0
    %1126 = vmatpush1.msra.mxu0 %v1120
    %1127 = vmatprep.subr.mxu0 0.0
    %1128 = vmatpush1.msra.mxu0 0.0
    %1129 = vmatprep.subr.mxu0 0.0
    %1130 = vmatpush1.msra.mxu0 0.0
    %1131 = vmatprep.subr.mxu0 0.0
    %1132 = vmatpush1.msra.mxu0 0.0
    %1133 = vmatprep.subr.mxu0 0.0
    %1134 = vmatpush1.msra.mxu0 0.0
    %1135 = vmatprep.subr.mxu0 0.0
    %1136 = vmatpush1.msra.mxu0 0.0
    %1137 = vmatprep.subr.mxu0 0.0
    %1138 = vmatpush1.msra.mxu0 0.0
    %1139 = vmatprep.subr.mxu0 0.0
    %1140 = vmatpush1.msra.mxu0 0.0
    %1141 = vmatprep.subr.mxu0 0.0
    %1142 = vmatpush1.msra.mxu0 0.0
    %1143 = vmatprep.subr.mxu0 0.0
    %1144 = vmatpush1.msra.mxu0 0.0
    %1145 = vmatprep.subr.mxu0 0.0
    %1146 = vmatpush1.msra.mxu0 0.0
    %1147 = vmatprep.subr.mxu0 0.0
    %1148 = vmatpush1.msra.mxu0 0.0
    %1149 = vmatprep.subr.mxu0 0.0
    %1150 = vmatpush1.msra.mxu0 0.0
    %1151 = vmatprep.subr.mxu0 0.0
    %1152 = vmatpush1.msra.mxu0 0.0
    %1153 = vmatprep.subr.mxu0 0.0
    %1154 = vmatpush1.msra.mxu0 0.0
    %1155 = vmatprep.subr.mxu0 0.0
    %1156 = vmatpush1.msra.mxu0 0.0
    %1157 = vmatprep.subr.mxu0 0.0
    %1158 = vmatpush1.msra.mxu0 0.0
    %1159 = vmatprep.subr.mxu0 0.0
    %1160 = vmatpush1.msra.mxu0 0.0
    %1161 = vmatprep.subr.mxu0 0.0
    %1162 = vmatpush1.msra.mxu0 0.0
    %1163 = vmatprep.subr.mxu0 0.0
    %1164 = vmatpush1.msra.mxu0 0.0
    %1165 = vmatprep.subr.mxu0 0.0
    %1166 = vmatpush1.msra.mxu0 0.0
    %1167 = vmatprep.subr.mxu0 0.0
    %1168 = vmatpush1.msra.mxu0 0.0
    %1169 = vmatprep.subr.mxu0 0.0
    %1170 = vmatpush1.msra.mxu0 0.0
    %1171 = vmatprep.subr.mxu0 0.0
    %1172 = vmatpush1.msra.mxu0 0.0
    %1173 = vmatprep.subr.mxu0 0.0
    %1174 = vmatpush1.msra.mxu0 0.0
    %1175 = vmatprep.subr.mxu0 0.0
    %1176 = vmatpush1.msra.mxu0 0.0
    %1177 = vmatprep.subr.mxu0 0.0
    %1178 = vmatpush1.msra.mxu0 0.0
    %1179 = vmatprep.subr.mxu0 0.0
    %1180 = vmatpush1.msra.mxu0 0.0
    %1181 = vmatprep.subr.mxu0 0.0
    %1182 = vmatpush1.msra.mxu0 0.0
    %1183 = vmatprep.subr.mxu0 0.0
    %1184 = vmatpush1.msra.mxu0 0.0
    %1185 = vmatprep.subr.mxu0 0.0
    %1186 = vmatpush1.msra.mxu0 0.0
    %1187 = vmatprep.subr.mxu0 0.0
    %1188 = vmatpush1.msra.mxu0 0.0
    %1189 = vmatprep.mubr.f32.mxu0 0.0
    %1190 = vmatmul.mubr.f32.gmra.mrb[0].mxu0 %v1123
    %v1191 = vpop.f32.mrb[0].mxu0
    %v1192 = vadd.f32 0.0, %v1191
    %v1193 = vpop.f32.mrb[0].mxu0
    %1194 = vdwg.mxu0
    %1195 = vrot.lane.b32.xlu0 %v261, 80
    %v1196 = vpop.permute.xlu0 %1195
    %v1199 = vsel %vm266, %v1118, 0
    %1201 = vmatprep.subr.mxu0 0.0
    %1202 = vmatpush1.msra.mxu0 %v1196
    %1203 = vmatprep.subr.mxu0 0.0
    %1204 = vmatpush1.msra.mxu0 0.0
    %1205 = vmatprep.subr.mxu0 0.0
    %1206 = vmatpush1.msra.mxu0 0.0
    %1207 = vmatprep.subr.mxu0 0.0
    %1208 = vmatpush1.msra.mxu0 0.0
    %1209 = vmatprep.subr.mxu0 0.0
    %1210 = vmatpush1.msra.mxu0 0.0
    %1211 = vmatprep.subr.mxu0 0.0
    %1212 = vmatpush1.msra.mxu0 0.0
    %1213 = vmatprep.subr.mxu0 0.0
    %1214 = vmatpush1.msra.mxu0 0.0
    %1215 = vmatprep.subr.mxu0 0.0
    %1216 = vmatpush1.msra.mxu0 0.0
    %1217 = vmatprep.subr.mxu0 0.0
    %1218 = vmatpush1.msra.mxu0 0.0
    %1219 = vmatprep.subr.mxu0 0.0
    %1220 = vmatpush1.msra.mxu0 0.0
    %1221 = vmatprep.subr.mxu0 0.0
    %1222 = vmatpush1.msra.mxu0 0.0
    %1223 = vmatprep.subr.mxu0 0.0
    %1224 = vmatpush1.msra.mxu0 0.0
    %1225 = vmatprep.subr.mxu0 0.0
    %1226 = vmatpush1.msra.mxu0 0.0
    %1227 = vmatprep.subr.mxu0 0.0
    %1228 = vmatpush1.msra.mxu0 0.0
    %1229 = vmatprep.subr.mxu0 0.0
    %1230 = vmatpush1.msra.mxu0 0.0
    %1231 = vmatprep.subr.mxu0 0.0
    %1232 = vmatpush1.msra.mxu0 0.0
    %1233 = vmatprep.subr.mxu0 0.0
    %1234 = vmatpush1.msra.mxu0 0.0
    %1235 = vmatprep.subr.mxu0 0.0
    %1236 = vmatpush1.msra.mxu0 0.0
    %1237 = vmatprep.subr.mxu0 0.0
    %1238 = vmatpush1.msra.mxu0 0.0
    %1239 = vmatprep.subr.mxu0 0.0
    %1240 = vmatpush1.msra.mxu0 0.0
    %1241 = vmatprep.subr.mxu0 0.0
    %1242 = vmatpush1.msra.mxu0 0.0
    %1243 = vmatprep.subr.mxu0 0.0
    %1244 = vmatpush1.msra.mxu0 0.0
    %1245 = vmatprep.subr.mxu0 0.0
    %1246 = vmatpush1.msra.mxu0 0.0
    %1247 = vmatprep.subr.mxu0 0.0
    %1248 = vmatpush1.msra.mxu0 0.0
    %1249 = vmatprep.subr.mxu0 0.0
    %1250 = vmatpush1.msra.mxu0 0.0
    %1251 = vmatprep.subr.mxu0 0.0
    %1252 = vmatpush1.msra.mxu0 0.0
    %1253 = vmatprep.subr.mxu0 0.0
    %1254 = vmatpush1.msra.mxu0 0.0
    %1255 = vmatprep.subr.mxu0 0.0
    %1256 = vmatpush1.msra.mxu0 0.0
    %1257 = vmatprep.subr.mxu0 0.0
    %1258 = vmatpush1.msra.mxu0 0.0
    %1259 = vmatprep.subr.mxu0 0.0
    %1260 = vmatpush1.msra.mxu0 0.0
    %1261 = vmatprep.subr.mxu0 0.0
    %1262 = vmatpush1.msra.mxu0 0.0
    %1263 = vmatprep.subr.mxu0 0.0
    %1264 = vmatpush1.msra.mxu0 0.0
    %1265 = vmatprep.mubr.f32.mxu0 0.0
    %1266 = vmatmul.mubr.f32.gmra.mrb[0].mxu0 %v1199
    %v1267 = vpop.f32.mrb[0].mxu0
    %v1268 = vadd.f32 0.0, %v1267
    %v1269 = vpop.f32.mrb[0].mxu0
    %1270 = vdwg.mxu0
    %1271 = vrot.lane.b32.xlu0 %v264, 104
    %v1272 = vpop.permute.xlu0 %1271
    %1273 = vrot.lane.b32.xlu0 %v256, 104
    %v1274 = vpop.permute.xlu0 %1273
    %v1275 = vsel %vm266, %v1272, 0
    %v1277 = vsel %vm266, %v1274, 0
    %1279 = vmatprep.subr.mxu0 0.0
    %1280 = vmatpush1.xpose.msra.mxu0 %v1277
    %1281 = vmatprep.subr.mxu0 0.0
    %1282 = vmatpush1.xpose.msra.mxu0 0.0
    %1283 = vmatprep.subr.mxu0 0.0
    %1284 = vmatpush1.xpose.msra.mxu0 0.0
    %1285 = vmatprep.subr.mxu0 0.0
    %1286 = vmatpush1.xpose.msra.mxu0 0.0
    %1287 = vmatprep.subr.mxu0 0.0
    %1288 = vmatpush1.xpose.msra.mxu0 0.0
    %1289 = vmatprep.subr.mxu0 0.0
    %1290 = vmatpush1.xpose.msra.mxu0 0.0
    %1291 = vmatprep.subr.mxu0 0.0
    %1292 = vmatpush1.xpose.msra.mxu0 0.0
    %1293 = vmatprep.subr.mxu0 0.0
    %1294 = vmatpush1.xpose.msra.mxu0 0.0
    %1295 = vmatprep.subr.mxu0 0.0
    %1296 = vmatpush1.xpose.msra.mxu0 0.0
    %1297 = vmatprep.subr.mxu0 0.0
    %1298 = vmatpush1.xpose.msra.mxu0 0.0
    %1299 = vmatprep.subr.mxu0 0.0
    %1300 = vmatpush1.xpose.msra.mxu0 0.0
    %1301 = vmatprep.subr.mxu0 0.0
    %1302 = vmatpush1.xpose.msra.mxu0 0.0
    %1303 = vmatprep.subr.mxu0 0.0
    %1304 = vmatpush1.xpose.msra.mxu0 0.0
    %1305 = vmatprep.subr.mxu0 0.0
    %1306 = vmatpush1.xpose.msra.mxu0 0.0
    %1307 = vmatprep.subr.mxu0 0.0
    %1308 = vmatpush1.xpose.msra.mxu0 0.0
    %1309 = vmatprep.subr.mxu0 0.0
    %1310 = vmatpush1.xpose.msra.mxu0 0.0
    %1311 = vmatprep.subr.mxu0 0.0
    %1312 = vmatpush1.xpose.msra.mxu0 0.0
    %1313 = vmatprep.subr.mxu0 0.0
    %1314 = vmatpush1.xpose.msra.mxu0 0.0
    %1315 = vmatprep.subr.mxu0 0.0
    %1316 = vmatpush1.xpose.msra.mxu0 0.0
    %1317 = vmatprep.subr.mxu0 0.0
    %1318 = vmatpush1.xpose.msra.mxu0 0.0
    %1319 = vmatprep.subr.mxu0 0.0
    %1320 = vmatpush1.xpose.msra.mxu0 0.0
    %1321 = vmatprep.subr.mxu0 0.0
    %1322 = vmatpush1.xpose.msra.mxu0 0.0
    %1323 = vmatprep.subr.mxu0 0.0
    %1324 = vmatpush1.xpose.msra.mxu0 0.0
    %1325 = vmatprep.subr.mxu0 0.0
    %1326 = vmatpush1.xpose.msra.mxu0 0.0
    %1327 = vmatprep.subr.mxu0 0.0
    %1328 = vmatpush1.xpose.msra.mxu0 0.0
    %1329 = vmatprep.subr.mxu0 0.0
    %1330 = vmatpush1.xpose.msra.mxu0 0.0
    %1331 = vmatprep.subr.mxu0 0.0
    %1332 = vmatpush1.xpose.msra.mxu0 0.0
    %1333 = vmatprep.subr.mxu0 0.0
    %1334 = vmatpush1.xpose.msra.mxu0 0.0
    %1335 = vmatprep.subr.mxu0 0.0
    %1336 = vmatpush1.xpose.msra.mxu0 0.0
    %1337 = vmatprep.subr.mxu0 0.0
    %1338 = vmatpush1.xpose.msra.mxu0 0.0
    %1339 = vmatprep.subr.mxu0 0.0
    %1340 = vmatpush1.xpose.msra.mxu0 0.0
    %1341 = vmatprep.subr.mxu0 0.0
    %1342 = vmatpush1.xpose.msra.mxu0 0.0
    %1343 = vmatprep.mubr.f32.mxu0 0.0
    %1344 = vmatmul.mubr.f32.gmra.mrb[0].mxu0 %v1275
    %v1345 = vpop.f32.mrb[0].mxu0
    %v1346 = vadd.f32 0.0, %v1345
    %v1347 = vpop.f32.mrb[0].mxu0
    %1348 = vdwg.mxu0
    %1349 = vrot.lane.b32.xlu0 %v265, 104
    %v1350 = vpop.permute.xlu0 %1349
    %1351 = vrot.lane.b32.xlu0 %v261, 104
    %v1352 = vpop.permute.xlu0 %1351
    %v1353 = vsel %vm266, %v1350, 0
    %v1355 = vsel %vm266, %v1352, 0
    %1357 = vmatprep.subr.mxu0 0.0
    %1358 = vmatpush1.xpose.msra.mxu0 %v1355
    %1359 = vmatprep.subr.mxu0 0.0
    %1360 = vmatpush1.xpose.msra.mxu0 0.0
    %1361 = vmatprep.subr.mxu0 0.0
    %1362 = vmatpush1.xpose.msra.mxu0 0.0
    %1363 = vmatprep.subr.mxu0 0.0
    %1364 = vmatpush1.xpose.msra.mxu0 0.0
    %1365 = vmatprep.subr.mxu0 0.0
    %1366 = vmatpush1.xpose.msra.mxu0 0.0
    %1367 = vmatprep.subr.mxu0 0.0
    %1368 = vmatpush1.xpose.msra.mxu0 0.0
    %1369 = vmatprep.subr.mxu0 0.0
    %1370 = vmatpush1.xpose.msra.mxu0 0.0
    %1371 = vmatprep.subr.mxu0 0.0
    %1372 = vmatpush1.xpose.msra.mxu0 0.0
    %1373 = vmatprep.subr.mxu0 0.0
    %1374 = vmatpush1.xpose.msra.mxu0 0.0
    %1375 = vmatprep.subr.mxu0 0.0
    %1376 = vmatpush1.xpose.msra.mxu0 0.0
    %1377 = vmatprep.subr.mxu0 0.0
    %1378 = vmatpush1.xpose.msra.mxu0 0.0
    %1379 = vmatprep.subr.mxu0 0.0
    %1380 = vmatpush1.xpose.msra.mxu0 0.0
    %1381 = vmatprep.subr.mxu0 0.0
    %1382 = vmatpush1.xpose.msra.mxu0 0.0
    %1383 = vmatprep.subr.mxu0 0.0
    %1384 = vmatpush1.xpose.msra.mxu0 0.0
    %1385 = vmatprep.subr.mxu0 0.0
    %1386 = vmatpush1.xpose.msra.mxu0 0.0
    %1387 = vmatprep.subr.mxu0 0.0
    %1388 = vmatpush1.xpose.msra.mxu0 0.0
    %1389 = vmatprep.subr.mxu0 0.0
    %1390 = vmatpush1.xpose.msra.mxu0 0.0
    %1391 = vmatprep.subr.mxu0 0.0
    %1392 = vmatpush1.xpose.msra.mxu0 0.0
    %1393 = vmatprep.subr.mxu0 0.0
    %1394 = vmatpush1.xpose.msra.mxu0 0.0
    %1395 = vmatprep.subr.mxu0 0.0
    %1396 = vmatpush1.xpose.msra.mxu0 0.0
    %1397 = vmatprep.subr.mxu0 0.0
    %1398 = vmatpush1.xpose.msra.mxu0 0.0
    %1399 = vmatprep.subr.mxu0 0.0
    %1400 = vmatpush1.xpose.msra.mxu0 0.0
    %1401 = vmatprep.subr.mxu0 0.0
    %1402 = vmatpush1.xpose.msra.mxu0 0.0
    %1403 = vmatprep.subr.mxu0 0.0
    %1404 = vmatpush1.xpose.msra.mxu0 0.0
    %1405 = vmatprep.subr.mxu0 0.0
    %1406 = vmatpush1.xpose.msra.mxu0 0.0
    %1407 = vmatprep.subr.mxu0 0.0
    %1408 = vmatpush1.xpose.msra.mxu0 0.0
    %1409 = vmatprep.subr.mxu0 0.0
    %1410 = vmatpush1.xpose.msra.mxu0 0.0
    %1411 = vmatprep.subr.mxu0 0.0
    %1412 = vmatpush1.xpose.msra.mxu0 0.0
    %1413 = vmatprep.subr.mxu0 0.0
    %1414 = vmatpush1.xpose.msra.mxu0 0.0
    %1415 = vmatprep.subr.mxu0 0.0
    %1416 = vmatpush1.xpose.msra.mxu0 0.0
    %1417 = vmatprep.subr.mxu0 0.0
    %1418 = vmatpush1.xpose.msra.mxu0 0.0
    %1419 = vmatprep.subr.mxu0 0.0
    %1420 = vmatpush1.xpose.msra.mxu0 0.0
    %1421 = vmatprep.mubr.f32.mxu0 0.0
    %1422 = vmatmul.mubr.f32.gmra.mrb[0].mxu0 %v1353
    %v1423 = vpop.f32.mrb[0].mxu0
    %v1424 = vadd.f32 0.0, %v1423
    %v1425 = vpop.f32.mrb[0].mxu0
    %1426 = vdwg.mxu0
    %v1427 = vsel %vm266, %v1346, -inf
    %1428 = vmax.xlane.f32.xlu0 %v1427
    %v1429 = vpop.xlane.xlu0 %1428
    %v1430 = vsel %vm266, %v1424, -inf
    %1431 = vmax.xlane.f32.xlu0 %v1430
    %v1432 = vpop.xlane.xlu0 %1431
    %v1433 = vsub.f32 %v1346, %v1429
    %v1434 = vsub.f32 %v1424, %v1432
    %v1435 = vmul.f32 %v1433, 1.442695
    %v1436 = vpow.pop %v1435
    %v1437 = vmul.f32 %v1434, 1.442695
    %v1438 = vpow.pop %v1437
    %v1439 = vsel %vm266, %v1436, 0.0
    %1440 = vadd.xlane.f32.xlu0 %v1439
    %v1441 = vpop.xlane.xlu0 %1440
    %v1442 = vsel %vm266, %v1438, 0.0
    %1443 = vadd.xlane.f32.xlu0 %v1442
    %v1444 = vpop.xlane.xlu0 %1443
    %v1445 = vrcp.pop %v1441
    %v1446 = vrcp.pop %v1444
    %v1447 = vmul.f32 %v1441, %v1445
    %v1448 = vmul.f32 %v1444, %v1446
    %v1449 = vsub.f32 2.0, %v1447
    %v1450 = vsub.f32 2.0, %v1448
    %v1451 = vmul.f32 %v1445, %v1449
    %v1452 = vmul.f32 %v1446, %v1450
    %v1453 = vmul.f32 %v1436, %v1451
    %v1454 = vmul.f32 %v1438, %v1452
    %1455 = vrot.lane.b32.xlu0 %v256, 72
    %v1456 = vpop.permute.xlu0 %1455
    %v1459 = vsel %vm266, %v1453, 0
    %1461 = vmatprep.subr.mxu0 0.0
    %1462 = vmatpush1.msra.mxu0 %v1456
    %1463 = vmatprep.subr.mxu0 0.0
    %1464 = vmatpush1.msra.mxu0 0.0
    %1465 = vmatprep.subr.mxu0 0.0
    %1466 = vmatpush1.msra.mxu0 0.0
    %1467 = vmatprep.subr.mxu0 0.0
    %1468 = vmatpush1.msra.mxu0 0.0
    %1469 = vmatprep.subr.mxu0 0.0
    %1470 = vmatpush1.msra.mxu0 0.0
    %1471 = vmatprep.subr.mxu0 0.0
    %1472 = vmatpush1.msra.mxu0 0.0
    %1473 = vmatprep.subr.mxu0 0.0
    %1474 = vmatpush1.msra.mxu0 0.0
    %1475 = vmatprep.subr.mxu0 0.0
    %1476 = vmatpush1.msra.mxu0 0.0
    %1477 = vmatprep.subr.mxu0 0.0
    %1478 = vmatpush1.msra.mxu0 0.0
    %1479 = vmatprep.subr.mxu0 0.0
    %1480 = vmatpush1.msra.mxu0 0.0
    %1481 = vmatprep.subr.mxu0 0.0
    %1482 = vmatpush1.msra.mxu0 0.0
    %1483 = vmatprep.subr.mxu0 0.0
    %1484 = vmatpush1.msra.mxu0 0.0
    %1485 = vmatprep.subr.mxu0 0.0
    %1486 = vmatpush1.msra.mxu0 0.0
    %1487 = vmatprep.subr.mxu0 0.0
    %1488 = vmatpush1.msra.mxu0 0.0
    %1489 = vmatprep.subr.mxu0 0.0
    %1490 = vmatpush1.msra.mxu0 0.0
    %1491 = vmatprep.subr.mxu0 0.0
    %1492 = vmatpush1.msra.mxu0 0.0
    %1493 = vmatprep.subr.mxu0 0.0
    %1494 = vmatpush1.msra.mxu0 0.0
    %1495 = vmatprep.subr.mxu0 0.0
    %1496 = vmatpush1.msra.mxu0 0.0
    %1497 = vmatprep.subr.mxu0 0.0
    %1498 = vmatpush1.msra.mxu0 0.0
    %1499 = vmatprep.subr.mxu0 0.0
    %1500 = vmatpush1.msra.mxu0 0.0
    %1501 = vmatprep.subr.mxu0 0.0
    %1502 = vmatpush1.msra.mxu0 0.0
    %1503 = vmatprep.subr.mxu0 0.0
    %1504 = vmatpush1.msra.mxu0 0.0
    %1505 = vmatprep.subr.mxu0 0.0
    %1506 = vmatpush1.msra.mxu0 0.0
    %1507 = vmatprep.subr.mxu0 0.0
    %1508 = vmatpush1.msra.mxu0 0.0
    %1509 = vmatprep.subr.mxu0 0.0
    %1510 = vmatpush1.msra.mxu0 0.0
    %1511 = vmatprep.subr.mxu0 0.0
    %1512 = vmatpush1.msra.mxu0 0.0
    %1513 = vmatprep.subr.mxu0 0.0
    %1514 = vmatpush1.msra.mxu0 0.0
    %1515 = vmatprep.subr.mxu0 0.0
    %1516 = vmatpush1.msra.mxu0 0.0
    %1517 = vmatprep.subr.mxu0 0.0
    %1518 = vmatpush1.msra.mxu0 0.0
    %1519 = vmatprep.subr.mxu0 0.0
    %1520 = vmatpush1.msra.mxu0 0.0
    %1521 = vmatprep.subr.mxu0 0.0
    %1522 = vmatpush1.msra.mxu0 0.0
    %1523 = vmatprep.subr.mxu0 0.0
    %1524 = vmatpush1.msra.mxu0 0.0
    %1525 = vmatprep.mubr.f32.mxu0 0.0
    %1526 = vmatmul.mubr.f32.gmra.mrb[0].mxu0 %v1459
    %v1527 = vpop.f32.mrb[0].mxu0
    %v1528 = vadd.f32 0.0, %v1527
    %v1529 = vpop.f32.mrb[0].mxu0
    %1530 = vdwg.mxu0
    %1531 = vrot.lane.b32.xlu0 %v261, 72
    %v1532 = vpop.permute.xlu0 %1531
    %v1535 = vsel %vm266, %v1454, 0
    %1537 = vmatprep.subr.mxu0 0.0
    %1538 = vmatpush1.msra.mxu0 %v1532
    %1539 = vmatprep.subr.mxu0 0.0
    %1540 = vmatpush1.msra.mxu0 0.0
    %1541 = vmatprep.subr.mxu0 0.0
    %1542 = vmatpush1.msra.mxu0 0.0
    %1543 = vmatprep.subr.mxu0 0.0
    %1544 = vmatpush1.msra.mxu0 0.0
    %1545 = vmatprep.subr.mxu0 0.0
    %1546 = vmatpush1.msra.mxu0 0.0
    %1547 = vmatprep.subr.mxu0 0.0
    %1548 = vmatpush1.msra.mxu0 0.0
    %1549 = vmatprep.subr.mxu0 0.0
    %1550 = vmatpush1.msra.mxu0 0.0
    %1551 = vmatprep.subr.mxu0 0.0
    %1552 = vmatpush1.msra.mxu0 0.0
    %1553 = vmatprep.subr.mxu0 0.0
    %1554 = vmatpush1.msra.mxu0 0.0
    %1555 = vmatprep.subr.mxu0 0.0
    %1556 = vmatpush1.msra.mxu0 0.0
    %1557 = vmatprep.subr.mxu0 0.0
    %1558 = vmatpush1.msra.mxu0 0.0
    %1559 = vmatprep.subr.mxu0 0.0
    %1560 = vmatpush1.msra.mxu0 0.0
    %1561 = vmatprep.subr.mxu0 0.0
    %1562 = vmatpush1.msra.mxu0 0.0
    %1563 = vmatprep.subr.mxu0 0.0
    %1564 = vmatpush1.msra.mxu0 0.0
    %1565 = vmatprep.subr.mxu0 0.0
    %1566 = vmatpush1.msra.mxu0 0.0
    %1567 = vmatprep.subr.mxu0 0.0
    %1568 = vmatpush1.msra.mxu0 0.0
    %1569 = vmatprep.subr.mxu0 0.0
    %1570 = vmatpush1.msra.mxu0 0.0
    %1571 = vmatprep.subr.mxu0 0.0
    %1572 = vmatpush1.msra.mxu0 0.0
    %1573 = vmatprep.subr.mxu0 0.0
    %1574 = vmatpush1.msra.mxu0 0.0
    %1575 = vmatprep.subr.mxu0 0.0
    %1576 = vmatpush1.msra.mxu0 0.0
    %1577 = vmatprep.subr.mxu0 0.0
    %1578 = vmatpush1.msra.mxu0 0.0
    %1579 = vmatprep.subr.mxu0 0.0
    %1580 = vmatpush1.msra.mxu0 0.0
    %1581 = vmatprep.subr.mxu0 0.0
    %1582 = vmatpush1.msra.mxu0 0.0
    %1583 = vmatprep.subr.mxu0 0.0
    %1584 = vmatpush1.msra.mxu0 0.0
    %1585 = vmatprep.subr.mxu0 0.0
    %1586 = vmatpush1.msra.mxu0 0.0
    %1587 = vmatprep.subr.mxu0 0.0
    %1588 = vmatpush1.msra.mxu0 0.0
    %1589 = vmatprep.subr.mxu0 0.0
    %1590 = vmatpush1.msra.mxu0 0.0
    %1591 = vmatprep.subr.mxu0 0.0
    %1592 = vmatpush1.msra.mxu0 0.0
    %1593 = vmatprep.subr.mxu0 0.0
    %1594 = vmatpush1.msra.mxu0 0.0
    %1595 = vmatprep.subr.mxu0 0.0
    %1596 = vmatpush1.msra.mxu0 0.0
    %1597 = vmatprep.subr.mxu0 0.0
    %1598 = vmatpush1.msra.mxu0 0.0
    %1599 = vmatprep.subr.mxu0 0.0
    %1600 = vmatpush1.msra.mxu0 0.0
    %1601 = vmatprep.mubr.f32.mxu0 0.0
    %1602 = vmatmul.mubr.f32.gmra.mrb[0].mxu0 %v1535
    %v1603 = vpop.f32.mrb[0].mxu0
    %v1604 = vadd.f32 0.0, %v1603
    %v1605 = vpop.f32.mrb[0].mxu0
    %1606 = vdwg.mxu0
    %1609 = vrot.lane.b32.xlu0 %v856, 8
    %v1610 = vpop.permute.xlu0 %1609
    %1611 = vrot.lane.b32.xlu0 %v932, 8
    %v1612 = vpop.permute.xlu0 %1611
    %1617 = vrot.lane.b32.xlu0 %v1192, 16
    %v1618 = vpop.permute.xlu0 %1617
    %1619 = vrot.lane.b32.xlu0 %v1268, 16
    %v1620 = vpop.permute.xlu0 %1619
    %1625 = vrot.lane.b32.xlu0 %v1528, 24
    %v1626 = vpop.permute.xlu0 %1625
    %1627 = vrot.lane.b32.xlu0 %v1604, 24
    %v1628 = vpop.permute.xlu0 %1627
    %v1631 = vsel %vm266, %v520, %v1610
    %v1632 = vsel %vm266, %v596, %v1612
    %vm1633 = vcmask 130048
    %v1634 = vsel %vm1633, %v1631, %v1618
    %v1635 = vsel %vm1633, %v1632, %v1620
    %vm1636 = vcmask 195584
    %v1637 = vsel %vm1636, %v1634, %v1626
    %v1638 = vsel %vm1636, %v1635, %v1628
    %v1639 = vld [vmem:[#allocation10] sm:$0xff]
    %v1640 = vld [vmem:[#allocation10 + $0x8] sm:$0xff]
    %v1641 = vld [vmem:[#allocation10 + $0x10] sm:$0xff]
    %v1642 = vld [vmem:[#allocation10 + $0x18] sm:$0xff]
    %v1644 = vsel %vm97, %v1637, 0
    %v1647 = vsel %vm97, %v1638, 0
    %1649 = vmatprep.subr.mxu0 0.0
    %1650 = vmatpush1.msra.mxu0 %v1639
    %1651 = vmatprep.subr.mxu0 0.0
    %1652 = vmatpush1.msra.mxu0 %v1640
    %1653 = vmatprep.subr.mxu0 0.0
    %1654 = vmatpush1.msra.mxu0 %v1641
    %1655 = vmatprep.subr.mxu0 0.0
    %1656 = vmatpush1.msra.mxu0 %v1642
    %1657 = vmatprep.subr.mxu0 0.0
    %1658 = vmatpush1.msra.mxu0 0.0
    %1659 = vmatprep.subr.mxu0 0.0
    %1660 = vmatpush1.msra.mxu0 0.0
    %1661 = vmatprep.subr.mxu0 0.0
    %1662 = vmatpush1.msra.mxu0 0.0
    %1663 = vmatprep.subr.mxu0 0.0
    %1664 = vmatpush1.msra.mxu0 0.0
    %1665 = vmatprep.subr.mxu0 0.0
    %1666 = vmatpush1.msra.mxu0 0.0
    %1667 = vmatprep.subr.mxu0 0.0
    %1668 = vmatpush1.msra.mxu0 0.0
    %1669 = vmatprep.subr.mxu0 0.0
    %1670 = vmatpush1.msra.mxu0 0.0
    %1671 = vmatprep.subr.mxu0 0.0
    %1672 = vmatpush1.msra.mxu0 0.0
    %1673 = vmatprep.subr.mxu0 0.0
    %1674 = vmatpush1.msra.mxu0 0.0
    %1675 = vmatprep.subr.mxu0 0.0
    %1676 = vmatpush1.msra.mxu0 0.0
    %1677 = vmatprep.subr.mxu0 0.0
    %1678 = vmatpush1.msra.mxu0 0.0
    %1679 = vmatprep.subr.mxu0 0.0
    %1680 = vmatpush1.msra.mxu0 0.0
    %1681 = vmatprep.subr.mxu0 0.0
    %1682 = vmatpush1.msra.mxu0 0.0
    %1683 = vmatprep.subr.mxu0 0.0
    %1684 = vmatpush1.msra.mxu0 0.0
    %1685 = vmatprep.subr.mxu0 0.0
    %1686 = vmatpush1.msra.mxu0 0.0
    %1687 = vmatprep.subr.mxu0 0.0
    %1688 = vmatpush1.msra.mxu0 0.0
    %1689 = vmatprep.subr.mxu0 0.0
    %1690 = vmatpush1.msra.mxu0 0.0
    %1691 = vmatprep.subr.mxu0 0.0
    %1692 = vmatpush1.msra.mxu0 0.0
    %1693 = vmatprep.subr.mxu0 0.0
    %1694 = vmatpush1.msra.mxu0 0.0
    %1695 = vmatprep.subr.mxu0 0.0
    %1696 = vmatpush1.msra.mxu0 0.0
    %1697 = vmatprep.subr.mxu0 0.0
    %1698 = vmatpush1.msra.mxu0 0.0
    %1699 = vmatprep.subr.mxu0 0.0
    %1700 = vmatpush1.msra.mxu0 0.0
    %1701 = vmatprep.subr.mxu0 0.0
    %1702 = vmatpush1.msra.mxu0 0.0
    %1703 = vmatprep.subr.mxu0 0.0
    %1704 = vmatpush1.msra.mxu0 0.0
    %1705 = vmatprep.subr.mxu0 0.0
    %1706 = vmatpush1.msra.mxu0 0.0
    %1707 = vmatprep.subr.mxu0 0.0
    %1708 = vmatpush1.msra.mxu0 0.0
    %1709 = vmatprep.subr.mxu0 0.0
    %1710 = vmatpush1.msra.mxu0 0.0
    %1711 = vmatprep.subr.mxu0 0.0
    %1712 = vmatpush1.msra.mxu0 0.0
    %1713 = vmatprep.mubr.f32.mxu0 0.0
    %1714 = vmatmul.mubr.f32.gmra.mrb[0].mxu0 %v1644
    %v1715 = vpop.f32.mrb[0].mxu0
    %v1716 = vadd.f32 0.0, %v1715
    %v1717 = vpop.f32.mrb[0].mxu0
    %1718 = vmatprep.mubr.f32.mxu0 0.0
    %1719 = vmatmul.mubr.f32.gmra.mrb[0].mxu0 %v1647
    %v1720 = vpop.f32.mrb[0].mxu0
    %v1721 = vadd.f32 0.0, %v1720
    %v1722 = vpop.f32.mrb[0].mxu0
    %1723 = vdwg.mxu0
    %1724 = vst.msk [vmem:[#allocation11] sm:$0xff] %vm97, %v1716
    %1725 = vst.msk [vmem:[#allocation11 + $0x8] sm:$0xff] %vm97, %v1721
    // Predicated region
    $region42: #{tpu_custom_call.1} parent=1 // pred_check
      _
    $region43: #{tpu_custom_call.1} parent=1 // pred_check_branch
      %1727 = sbr.rel (0) target = $region45
    $region44: #{tpu_custom_call.1} parent=1 // pred_region
      %s1729 = ssub.s32 256, 256
      %1730 = vsyncadd [#allocation4], %s1729
      %s1731 = sshll.u32 [#allocation11], 4
      %s1732 = int_to_ptr.vmem [resolvable:$true] %s1731
      %1737 = dma.vmem_to_hbm [thread:$0]  %s1732, 256, %s5, [#allocation4], 128, 128, 8
    $region45: #{tpu_custom_call.1} parent=1 // pred_fallthru
      _
    // Predicated region
    $region46: #{tpu_custom_call.1} parent=1 // pred_check
      _
    $region47: #{tpu_custom_call.1} parent=1 // pred_check_branch
      %1739 = sbr.rel (0) target = $region49
    $region48: #{tpu_custom_call.1} parent=1 // pred_region
      %1740 = dma.done [#allocation4], 256
    $region49: #{tpu_custom_call.1} parent=1 // pred_fallthru
      _
    %1741 = vsyncpa [#allocation3], 1
    %1742 = vsyncpa [#allocation6], 1
    %1743 = vsyncpa [#allocation9], 1
    %1744 = vsyncpa [#allocation4], 1

</llo_original>
